<compile_context>
chip_gen: v7x
topology: tpu7x:2x2x1
jax: 0.10.0
libtpu: 0.0.40
codegen_flags: <defaults>
</compile_context>

<pallas_src>
import numpy as np
import jax
import jax.numpy as jnp
from jax.experimental import pallas as pl
from jax.experimental.pallas import tpu as pltpu

# Small, module-consistent shapes.
N_NODES = 16     # nodes per graph
IN_DIM = 32      # input_dim
OUT_DIM = 16     # output_dim (per head)
HEADS = 4        # head_num
HC = OUT_DIM * HEADS          # 64
HC2 = 2 * HC                  # 128 -> lane-dense fused projection output
NEG_SLOPE = 0.2  # GATConv LeakyReLU slope
LN_EPS = 1e-5


def gat_encoder_kernel(x_ref, w_ref, amap_ref, adj_ref, pvec_ref,
                       out_ref, attn_ref, y_sc):
    x = x_ref[0]                                                        # (N, F)
    mask = adj_ref[0]                                                   # (N, N)

    # Fused src/dst projection: (N, F) @ (F, 2*HC) -> (N, 128) lane-dense.
    proj = jnp.dot(x, w_ref[...], preferred_element_type=jnp.float32)
    xs = proj[:, :HC]                                                   # x @ W_src
    # x @ W_dst (proj[:, HC:]) only feeds the logits through the fused map.

    # Fused per-head attention logits: (N, 128) @ (128, 2*H) -> (N, 2*H)
    # columns [0:H] = a_src, columns [H:2H] = a_dst.
    a = jnp.dot(proj, amap_ref[...], preferred_element_type=jnp.float32)
    a_t = a.T                                                           # (2*H, N)

    alphas = []
    for h in range(HEADS):
        # e[i, j] = LeakyReLU(a_dst[i, h] + a_src[j, h]) for edge j -> i.
        e = a[:, HEADS + h:HEADS + h + 1] + a_t[h:h + 1, :]             # (N, N)
        e = jnp.where(e > 0, e, NEG_SLOPE * e)
        # Unmasked row-max is still an upper bound -> exp never overflows.
        # The numerator mask alone zeroes non-edges; self-loops keep denom > 0.
        m = jnp.max(e, axis=-1, keepdims=True)
        p = jnp.exp(e - m) * mask
        denom = jnp.maximum(jnp.sum(p, axis=-1, keepdims=True), 1e-16)
        alpha = p * pl.reciprocal(denom, approx=True)                   # EUP
        alphas.append(alpha)
        # Per-head aggregation written at a static lane offset (no concat).
        y_sc[:, h * OUT_DIM:(h + 1) * OUT_DIM] = jnp.dot(
            alpha, xs[:, h * OUT_DIM:(h + 1) * OUT_DIM],
            preferred_element_type=jnp.float32)

    # Single stacked attention store instead of four small ones.
    attn_ref[0] = jnp.stack(alphas, axis=0)                             # (H, N, N)

    bias = pvec_ref[0:1, :]
    gamma = pvec_ref[1:2, :]
    beta = pvec_ref[2:3, :]
    pw = pvec_ref[3:4, :]

    y = y_sc[...] + bias                                                # (N, HC)

    # LayerNorm over the feature axis.
    mu = jnp.mean(y, axis=-1, keepdims=True)
    var = jnp.mean((y - mu) ** 2, axis=-1, keepdims=True)
    yn = (y - mu) * jax.lax.rsqrt(var + LN_EPS)
    yn = yn * gamma + beta

    # PReLU with per-channel weight.
    out_ref[0] = jnp.where(yn > 0.0, yn, pw * yn)


def pack_params(w_src, w_dst, att_src, att_dst, bias, gamma, beta, prelu_w):
    """One-time parameter fusion (do this once, outside the hot path)."""
    eye_h = jnp.eye(HEADS, dtype=jnp.float32)
    # Block-diagonal per-head maps: amap_src[h*C + c, h'] = att_src[h, c] iff h==h'.
    amap_src = (att_src[:, :, None] * eye_h[:, None, :]).reshape(HC, HEADS)
    amap_dst = (att_dst[:, :, None] * eye_h[:, None, :]).reshape(HC, HEADS)
    zeros = jnp.zeros((HC, HEADS), jnp.float32)
    amap_fused = jnp.concatenate(
        [jnp.concatenate([amap_src, zeros], axis=1),
         jnp.concatenate([zeros, amap_dst], axis=1)], axis=0)           # (2HC, 2H)
    w_fused = jnp.concatenate([w_src, w_dst], axis=1)                   # (F, 2HC)
    pvec = jnp.concatenate([bias, gamma, beta, prelu_w], axis=0)        # (4, HC)
    return dict(w_fused=w_fused, amap_fused=amap_fused, pvec=pvec)


def gat_encoder_forward(edge_index, x, packed):
    """edge_index: (2, E) int32 [src; dst] with self-loops included.
       x: (B, N, F) batch of graphs sharing the edge structure (or (N, F))."""
    if x.ndim == 2:
        x = x[None]
    b, n, f = x.shape
    src, dst = edge_index[0], edge_index[1]

    # Dense adjacency mask per graph: adj[dst, src] = 1.
    adj1 = jnp.zeros((n, n), jnp.float32).at[dst, src].set(1.0)
    adj = jnp.broadcast_to(adj1[None], (b, n, n))

    out_x, attn_dense = pl.pallas_call(
        gat_encoder_kernel,
        grid=(b,),
        in_specs=[
            pl.BlockSpec((1, n, f), lambda g: (g, 0, 0)),               # x (per graph)
            pl.BlockSpec((f, HC2), lambda g: (0, 0)),                   # fused weight (resident)
            pl.BlockSpec((HC2, 2 * HEADS), lambda g: (0, 0)),           # fused att map (resident)
            pl.BlockSpec((1, n, n), lambda g: (g, 0, 0)),               # adjacency (per graph)
            pl.BlockSpec((4, HC), lambda g: (0, 0)),                    # packed bias/gamma/beta/pw
        ],
        out_specs=[
            pl.BlockSpec((1, n, HC), lambda g: (g, 0, 0)),
            pl.BlockSpec((1, HEADS, n, n), lambda g: (g, 0, 0, 0)),
        ],
        out_shape=(
            jax.ShapeDtypeStruct((b, n, HC), jnp.float32),
            jax.ShapeDtypeStruct((b, HEADS, n, n), jnp.float32),
        ),
        scratch_shapes=[pltpu.VMEM((n, HC), jnp.float32)],
        compiler_params=pltpu.CompilerParams(dimension_semantics=("parallel",)),
    )(x, packed["w_fused"], packed["amap_fused"], adj, packed["pvec"])

    # Per-edge attention in edge_index order, shape (B, E, H).
    # TODO(synk): PyG SparseTensor.coo() returns CSR (dst-sorted) edge order;
    #             values per edge are identical, ordering may differ.
    attention = jnp.transpose(attn_dense[:, :, dst, src], (0, 2, 1))
    return out_x, attention, attn_dense


def reference(x, w_src, w_dst, att_src, att_dst, adj, bias, gamma, beta, pw):
    n = x.shape[0]
    xs = x @ w_src
    xd = x @ w_dst
    a_s = (xs.reshape(n, HEADS, OUT_DIM) * att_src[None]).sum(-1)       # (N, H)
    a_d = (xd.reshape(n, HEADS, OUT_DIM) * att_dst[None]).sum(-1)       # (N, H)
    e = a_d[:, None, :] + a_s[None, :, :]                               # [dst, src, h]
    e = jnp.where(e > 0, e, NEG_SLOPE * e)
    e = jnp.where(adj[..., None] > 0, e, -1e30)
    e = e - e.max(axis=1, keepdims=True)
    p = jnp.exp(e) * adj[..., None]
    alpha = p / jnp.maximum(p.sum(axis=1, keepdims=True), 1e-16)
    out = jnp.einsum("ijh,jhc->ihc", alpha, xs.reshape(n, HEADS, OUT_DIM)).reshape(n, HC)
    out = out + bias
    mu = out.mean(-1, keepdims=True)
    var = ((out - mu) ** 2).mean(-1, keepdims=True)
    yn = (out - mu) / jnp.sqrt(var + LN_EPS) * gamma + beta
    return jnp.where(yn > 0, yn, pw * yn), jnp.transpose(alpha, (2, 0, 1))


if __name__ == "__main__":
    key = jax.random.PRNGKey(0)
    ks = jax.random.split(key, 6)

    B = 4  # batch of graphs sharing topology (amortizes fixed overhead)
    x = jax.random.normal(ks[0], (B, N_NODES, IN_DIM), jnp.float32)

    # Deterministic parameter init (shapes from GATConv / LayerNorm / PReLU).
    w_src = jax.random.normal(ks[1], (IN_DIM, HC), jnp.float32) / np.sqrt(IN_DIM)
    w_dst = jax.random.normal(ks[2], (IN_DIM, HC), jnp.float32) / np.sqrt(IN_DIM)
    att_src = jax.random.normal(ks[3], (HEADS, OUT_DIM), jnp.float32) * 0.1
    att_dst = jax.random.normal(ks[4], (HEADS, OUT_DIM), jnp.float32) * 0.1
    bias = jnp.zeros((1, HC), jnp.float32)
    gamma = jnp.ones((1, HC), jnp.float32)       # LayerNorm weight
    beta = jnp.zeros((1, HC), jnp.float32)       # LayerNorm bias
    prelu_w = jnp.full((1, HC), 0.25, jnp.float32)

    packed = pack_params(w_src, w_dst, att_src, att_dst, bias, gamma, beta, prelu_w)

    # Ring graph (both directions) + self-loops (PyG GATConv adds self-loops).
    idx = np.arange(N_NODES)
    src = np.concatenate([idx, (idx + 1) % N_NODES, idx]).astype(np.int32)
    dst = np.concatenate([(idx + 1) % N_NODES, idx, idx]).astype(np.int32)
    edge_index = jnp.stack([jnp.asarray(src), jnp.asarray(dst)], axis=0)   # (2, E)

    out_x, attention, attn_dense = gat_encoder_forward(edge_index, x, packed)
    out_x = jax.block_until_ready(out_x)
    attention = jax.block_until_ready(attention)

    # Pure-JAX reference check (per graph).
    adj = jnp.zeros((N_NODES, N_NODES), jnp.float32).at[dst, src].set(1.0)
    for g in range(B):
        ref_x, ref_attn = reference(x[g], w_src, w_dst, att_src, att_dst, adj,
                                    bias, gamma, beta, prelu_w)
        np.testing.assert_allclose(np.asarray(out_x[g]), np.asarray(ref_x),
                                   rtol=3e-3, atol=3e-3)
        np.testing.assert_allclose(np.asarray(attn_dense[g]), np.asarray(ref_attn),
                                   rtol=3e-3, atol=3e-3)

    assert out_x.shape == (B, N_NODES, HC)
    assert attention.shape == (B, edge_index.shape[1], HEADS)
    print("KERNEL_OK")
</pallas_src>

<mosaic_0001>
module attributes {stable_mosaic.version = 11 : i64} {
  func.func @gat_encoder_kernel(%arg0: i32, %arg1: memref<1x16x32xf32, #tpu.memory_space<vmem>>, %arg2: memref<32x128xf32, #tpu.memory_space<vmem>>, %arg3: memref<128x8xf32, #tpu.memory_space<vmem>>, %arg4: memref<1x16x16xf32, #tpu.memory_space<vmem>>, %arg5: memref<4x64xf32, #tpu.memory_space<vmem>>, %arg6: memref<1x16x64xf32, #tpu.memory_space<vmem>>, %arg7: memref<1x4x16x16xf32, #tpu.memory_space<vmem>>, %arg8: memref<16x64xf32, #tpu.memory_space<vmem>>) attributes {dimension_semantics = [#tpu.dimension_semantics<parallel>], iteration_bounds = array<i64: 4>, scalar_prefetch = 0 : i64, scratch_operands = 1 : i64, tpu.core_type = #tpu.core_type<tc>, window_params = [{transform_indices = @transform_0, window_bounds = array<i64: 1, 16, 32>}, {pipeline_mode = #tpu.pipeline_mode<synchronous>, transform_indices = @transform_1, window_bounds = array<i64: 32, 128>}, {pipeline_mode = #tpu.pipeline_mode<synchronous>, transform_indices = @transform_2, window_bounds = array<i64: 128, 8>}, {transform_indices = @transform_3, window_bounds = array<i64: 1, 16, 16>}, {pipeline_mode = #tpu.pipeline_mode<synchronous>, transform_indices = @transform_4, window_bounds = array<i64: 4, 64>}, {transform_indices = @transform_5, window_bounds = array<i64: 1, 16, 64>}, {transform_indices = @transform_6, window_bounds = array<i64: 1, 4, 16, 16>}]} {
    %c0 = arith.constant 0 : index
    %c0_0 = arith.constant 0 : index
    %c0_1 = arith.constant 0 : index
    %0 = vector.load %arg1[%c0, %c0_0, %c0_1] : memref<1x16x32xf32, #tpu.memory_space<vmem>>, vector<1x16x32xf32>
    %1 = vector.shape_cast %0 : vector<1x16x32xf32> to vector<16x32xf32>
    %c0_2 = arith.constant 0 : index
    %c0_3 = arith.constant 0 : index
    %c0_4 = arith.constant 0 : index
    %2 = vector.load %arg4[%c0_2, %c0_3, %c0_4] : memref<1x16x16xf32, #tpu.memory_space<vmem>>, vector<1x16x16xf32>
    %3 = vector.shape_cast %2 : vector<1x16x16xf32> to vector<16x16xf32>
    %c0_5 = arith.constant 0 : index
    %c0_6 = arith.constant 0 : index
    %4 = vector.load %arg2[%c0_5, %c0_6] : memref<32x128xf32, #tpu.memory_space<vmem>>, vector<32x128xf32>
    %cst = arith.constant dense<0.000000e+00> : vector<16x128xf32>
    %5 = tpu.matmul %1, %4, %cst {dimension_numbers = #tpu.dot_dimension_numbers<[1], [0], [0], [1], [0, 0, 1, 1], [], []>} : vector<16x32xf32>, vector<32x128xf32>, vector<16x128xf32> -> vector<16x128xf32>
    %6 = vector.extract_strided_slice %5 {offsets = [0, 0], sizes = [16, 64], strides = [1, 1]} : vector<16x128xf32> to vector<16x64xf32>
    %c0_7 = arith.constant 0 : index
    %c0_8 = arith.constant 0 : index
    %7 = vector.load %arg3[%c0_7, %c0_8] : memref<128x8xf32, #tpu.memory_space<vmem>>, vector<128x8xf32>
    %cst_9 = arith.constant dense<0.000000e+00> : vector<16x8xf32>
    %8 = tpu.matmul %5, %7, %cst_9 {dimension_numbers = #tpu.dot_dimension_numbers<[1], [0], [0], [1], [0, 0, 1, 1], [], []>} : vector<16x128xf32>, vector<128x8xf32>, vector<16x8xf32> -> vector<16x8xf32>
    %9 = tpu.transpose %8, [1, 0] : vector<16x8xf32> -> vector<8x16xf32>
    %10 = vector.extract_strided_slice %8 {offsets = [0, 4], sizes = [16, 1], strides = [1, 1]} : vector<16x8xf32> to vector<16x1xf32>
    %11 = vector.extract_strided_slice %9 {offsets = [0, 0], sizes = [1, 16], strides = [1, 1]} : vector<8x16xf32> to vector<1x16xf32>
    %12 = vector.broadcast %10 : vector<16x1xf32> to vector<16x16xf32>
    %13 = vector.broadcast %11 : vector<1x16xf32> to vector<16x16xf32>
    %14 = arith.addf %12, %13 : vector<16x16xf32>
    %cst_10 = arith.constant 0.000000e+00 : f32
    %15 = vector.broadcast %cst_10 : f32 to vector<16x16xf32>
    %16 = arith.cmpf ogt, %14, %15 : vector<16x16xf32>
    %cst_11 = arith.constant 2.000000e-01 : f32
    %17 = vector.broadcast %cst_11 : f32 to vector<16x16xf32>
    %18 = arith.mulf %17, %14 : vector<16x16xf32>
    %19 = arith.select %16, %14, %18 : vector<16x16xi1>, vector<16x16xf32>
    %cst_12 = arith.constant dense<0xFF800000> : vector<16xf32>
    %20 = vector.multi_reduction <maximumf>, %19, %cst_12 [1] : vector<16x16xf32> to vector<16xf32>
    %21 = vector.shape_cast %20 : vector<16xf32> to vector<16x1xf32>
    %22 = vector.broadcast %21 : vector<16x1xf32> to vector<16x16xf32>
    %23 = arith.subf %19, %22 : vector<16x16xf32>
    %24 = math.exp %23 : vector<16x16xf32>
    %25 = arith.mulf %24, %3 : vector<16x16xf32>
    %cst_13 = arith.constant dense<0.000000e+00> : vector<16xf32>
    %26 = vector.multi_reduction <add>, %25, %cst_13 [1] : vector<16x16xf32> to vector<16xf32>
    %27 = vector.shape_cast %26 : vector<16xf32> to vector<16x1xf32>
    %cst_14 = arith.constant 1.000000e-16 : f32
    %28 = vector.broadcast %cst_14 : f32 to vector<16x1xf32>
    %29 = arith.maximumf %27, %28 : vector<16x1xf32>
    %30 = tpu.reciprocal %29 {approx = true} : vector<16x1xf32> -> vector<16x1xf32>
    %31 = vector.broadcast %30 : vector<16x1xf32> to vector<16x16xf32>
    %32 = arith.mulf %25, %31 : vector<16x16xf32>
    %33 = vector.extract_strided_slice %6 {offsets = [0, 0], sizes = [16, 16], strides = [1, 1]} : vector<16x64xf32> to vector<16x16xf32>
    %cst_15 = arith.constant dense<0.000000e+00> : vector<16x16xf32>
    %34 = tpu.matmul %32, %33, %cst_15 {dimension_numbers = #tpu.dot_dimension_numbers<[1], [0], [0], [1], [0, 0, 1, 1], [], []>} : vector<16x16xf32>, vector<16x16xf32>, vector<16x16xf32> -> vector<16x16xf32>
    %c0_16 = arith.constant 0 : index
    %c0_17 = arith.constant 0 : index
    %35 = vector.load %arg8[%c0_16, %c0_17] : memref<16x64xf32, #tpu.memory_space<vmem>>, vector<16x16xf32>
    tpu.vector_store %arg8[%c0_16, %c0_17], %34 {strides = array<i32>} : memref<16x64xf32, #tpu.memory_space<vmem>>, vector<16x16xf32>,
    %36 = vector.extract_strided_slice %8 {offsets = [0, 5], sizes = [16, 1], strides = [1, 1]} : vector<16x8xf32> to vector<16x1xf32>
    %37 = vector.extract_strided_slice %9 {offsets = [1, 0], sizes = [1, 16], strides = [1, 1]} : vector<8x16xf32> to vector<1x16xf32>
    %38 = vector.broadcast %36 : vector<16x1xf32> to vector<16x16xf32>
    %39 = vector.broadcast %37 : vector<1x16xf32> to vector<16x16xf32>
    %40 = arith.addf %38, %39 : vector<16x16xf32>
    %cst_18 = arith.constant 0.000000e+00 : f32
    %41 = vector.broadcast %cst_18 : f32 to vector<16x16xf32>
    %42 = arith.cmpf ogt, %40, %41 : vector<16x16xf32>
    %cst_19 = arith.constant 2.000000e-01 : f32
    %43 = vector.broadcast %cst_19 : f32 to vector<16x16xf32>
    %44 = arith.mulf %43, %40 : vector<16x16xf32>
    %45 = arith.select %42, %40, %44 : vector<16x16xi1>, vector<16x16xf32>
    %cst_20 = arith.constant dense<0xFF800000> : vector<16xf32>
    %46 = vector.multi_reduction <maximumf>, %45, %cst_20 [1] : vector<16x16xf32> to vector<16xf32>
    %47 = vector.shape_cast %46 : vector<16xf32> to vector<16x1xf32>
    %48 = vector.broadcast %47 : vector<16x1xf32> to vector<16x16xf32>
    %49 = arith.subf %45, %48 : vector<16x16xf32>
    %50 = math.exp %49 : vector<16x16xf32>
    %51 = arith.mulf %50, %3 : vector<16x16xf32>
    %cst_21 = arith.constant dense<0.000000e+00> : vector<16xf32>
    %52 = vector.multi_reduction <add>, %51, %cst_21 [1] : vector<16x16xf32> to vector<16xf32>
    %53 = vector.shape_cast %52 : vector<16xf32> to vector<16x1xf32>
    %cst_22 = arith.constant 1.000000e-16 : f32
    %54 = vector.broadcast %cst_22 : f32 to vector<16x1xf32>
    %55 = arith.maximumf %53, %54 : vector<16x1xf32>
    %56 = tpu.reciprocal %55 {approx = true} : vector<16x1xf32> -> vector<16x1xf32>
    %57 = vector.broadcast %56 : vector<16x1xf32> to vector<16x16xf32>
    %58 = arith.mulf %51, %57 : vector<16x16xf32>
    %59 = vector.extract_strided_slice %6 {offsets = [0, 16], sizes = [16, 16], strides = [1, 1]} : vector<16x64xf32> to vector<16x16xf32>
    %cst_23 = arith.constant dense<0.000000e+00> : vector<16x16xf32>
    %60 = tpu.matmul %58, %59, %cst_23 {dimension_numbers = #tpu.dot_dimension_numbers<[1], [0], [0], [1], [0, 0, 1, 1], [], []>} : vector<16x16xf32>, vector<16x16xf32>, vector<16x16xf32> -> vector<16x16xf32>
    %c0_24 = arith.constant 0 : index
    %c16 = arith.constant 16 : index
    %61 = vector.load %arg8[%c0_24, %c16] : memref<16x64xf32, #tpu.memory_space<vmem>>, vector<16x16xf32>
    tpu.vector_store %arg8[%c0_24, %c16], %60 {strides = array<i32>} : memref<16x64xf32, #tpu.memory_space<vmem>>, vector<16x16xf32>,
    %62 = vector.extract_strided_slice %8 {offsets = [0, 6], sizes = [16, 1], strides = [1, 1]} : vector<16x8xf32> to vector<16x1xf32>
    %63 = vector.extract_strided_slice %9 {offsets = [2, 0], sizes = [1, 16], strides = [1, 1]} : vector<8x16xf32> to vector<1x16xf32>
    %64 = vector.broadcast %62 : vector<16x1xf32> to vector<16x16xf32>
    %65 = vector.broadcast %63 : vector<1x16xf32> to vector<16x16xf32>
    %66 = arith.addf %64, %65 : vector<16x16xf32>
    %cst_25 = arith.constant 0.000000e+00 : f32
    %67 = vector.broadcast %cst_25 : f32 to vector<16x16xf32>
    %68 = arith.cmpf ogt, %66, %67 : vector<16x16xf32>
    %cst_26 = arith.constant 2.000000e-01 : f32
    %69 = vector.broadcast %cst_26 : f32 to vector<16x16xf32>
    %70 = arith.mulf %69, %66 : vector<16x16xf32>
    %71 = arith.select %68, %66, %70 : vector<16x16xi1>, vector<16x16xf32>
    %cst_27 = arith.constant dense<0xFF800000> : vector<16xf32>
    %72 = vector.multi_reduction <maximumf>, %71, %cst_27 [1] : vector<16x16xf32> to vector<16xf32>
    %73 = vector.shape_cast %72 : vector<16xf32> to vector<16x1xf32>
    %74 = vector.broadcast %73 : vector<16x1xf32> to vector<16x16xf32>
    %75 = arith.subf %71, %74 : vector<16x16xf32>
    %76 = math.exp %75 : vector<16x16xf32>
    %77 = arith.mulf %76, %3 : vector<16x16xf32>
    %cst_28 = arith.constant dense<0.000000e+00> : vector<16xf32>
    %78 = vector.multi_reduction <add>, %77, %cst_28 [1] : vector<16x16xf32> to vector<16xf32>
    %79 = vector.shape_cast %78 : vector<16xf32> to vector<16x1xf32>
    %cst_29 = arith.constant 1.000000e-16 : f32
    %80 = vector.broadcast %cst_29 : f32 to vector<16x1xf32>
    %81 = arith.maximumf %79, %80 : vector<16x1xf32>
    %82 = tpu.reciprocal %81 {approx = true} : vector<16x1xf32> -> vector<16x1xf32>
    %83 = vector.broadcast %82 : vector<16x1xf32> to vector<16x16xf32>
    %84 = arith.mulf %77, %83 : vector<16x16xf32>
    %85 = vector.extract_strided_slice %6 {offsets = [0, 32], sizes = [16, 16], strides = [1, 1]} : vector<16x64xf32> to vector<16x16xf32>
    %cst_30 = arith.constant dense<0.000000e+00> : vector<16x16xf32>
    %86 = tpu.matmul %84, %85, %cst_30 {dimension_numbers = #tpu.dot_dimension_numbers<[1], [0], [0], [1], [0, 0, 1, 1], [], []>} : vector<16x16xf32>, vector<16x16xf32>, vector<16x16xf32> -> vector<16x16xf32>
    %c0_31 = arith.constant 0 : index
    %c32 = arith.constant 32 : index
    %87 = vector.load %arg8[%c0_31, %c32] : memref<16x64xf32, #tpu.memory_space<vmem>>, vector<16x16xf32>
    tpu.vector_store %arg8[%c0_31, %c32], %86 {strides = array<i32>} : memref<16x64xf32, #tpu.memory_space<vmem>>, vector<16x16xf32>,
    %88 = vector.extract_strided_slice %8 {offsets = [0, 7], sizes = [16, 1], strides = [1, 1]} : vector<16x8xf32> to vector<16x1xf32>
    %89 = vector.extract_strided_slice %9 {offsets = [3, 0], sizes = [1, 16], strides = [1, 1]} : vector<8x16xf32> to vector<1x16xf32>
    %90 = vector.broadcast %88 : vector<16x1xf32> to vector<16x16xf32>
    %91 = vector.broadcast %89 : vector<1x16xf32> to vector<16x16xf32>
    %92 = arith.addf %90, %91 : vector<16x16xf32>
    %cst_32 = arith.constant 0.000000e+00 : f32
    %93 = vector.broadcast %cst_32 : f32 to vector<16x16xf32>
    %94 = arith.cmpf ogt, %92, %93 : vector<16x16xf32>
    %cst_33 = arith.constant 2.000000e-01 : f32
    %95 = vector.broadcast %cst_33 : f32 to vector<16x16xf32>
    %96 = arith.mulf %95, %92 : vector<16x16xf32>
    %97 = arith.select %94, %92, %96 : vector<16x16xi1>, vector<16x16xf32>
    %cst_34 = arith.constant dense<0xFF800000> : vector<16xf32>
    %98 = vector.multi_reduction <maximumf>, %97, %cst_34 [1] : vector<16x16xf32> to vector<16xf32>
    %99 = vector.shape_cast %98 : vector<16xf32> to vector<16x1xf32>
    %100 = vector.broadcast %99 : vector<16x1xf32> to vector<16x16xf32>
    %101 = arith.subf %97, %100 : vector<16x16xf32>
    %102 = math.exp %101 : vector<16x16xf32>
    %103 = arith.mulf %102, %3 : vector<16x16xf32>
    %cst_35 = arith.constant dense<0.000000e+00> : vector<16xf32>
    %104 = vector.multi_reduction <add>, %103, %cst_35 [1] : vector<16x16xf32> to vector<16xf32>
    %105 = vector.shape_cast %104 : vector<16xf32> to vector<16x1xf32>
    %cst_36 = arith.constant 1.000000e-16 : f32
    %106 = vector.broadcast %cst_36 : f32 to vector<16x1xf32>
    %107 = arith.maximumf %105, %106 : vector<16x1xf32>
    %108 = tpu.reciprocal %107 {approx = true} : vector<16x1xf32> -> vector<16x1xf32>
    %109 = vector.broadcast %108 : vector<16x1xf32> to vector<16x16xf32>
    %110 = arith.mulf %103, %109 : vector<16x16xf32>
    %111 = vector.extract_strided_slice %6 {offsets = [0, 48], sizes = [16, 16], strides = [1, 1]} : vector<16x64xf32> to vector<16x16xf32>
    %cst_37 = arith.constant dense<0.000000e+00> : vector<16x16xf32>
    %112 = tpu.matmul %110, %111, %cst_37 {dimension_numbers = #tpu.dot_dimension_numbers<[1], [0], [0], [1], [0, 0, 1, 1], [], []>} : vector<16x16xf32>, vector<16x16xf32>, vector<16x16xf32> -> vector<16x16xf32>
    %c0_38 = arith.constant 0 : index
    %c48 = arith.constant 48 : index
    %113 = vector.load %arg8[%c0_38, %c48] : memref<16x64xf32, #tpu.memory_space<vmem>>, vector<16x16xf32>
    tpu.vector_store %arg8[%c0_38, %c48], %112 {strides = array<i32>} : memref<16x64xf32, #tpu.memory_space<vmem>>, vector<16x16xf32>,
    %114 = vector.shape_cast %32 : vector<16x16xf32> to vector<1x16x16xf32>
    %115 = vector.shape_cast %58 : vector<16x16xf32> to vector<1x16x16xf32>
    %116 = vector.shape_cast %84 : vector<16x16xf32> to vector<1x16x16xf32>
    %117 = vector.shape_cast %110 : vector<16x16xf32> to vector<1x16x16xf32>
    %118 = tpu.concatenate %114, %115, %116, %117 in 0 : vector<1x16x16xf32>, vector<1x16x16xf32>, vector<1x16x16xf32>, vector<1x16x16xf32> -> vector<4x16x16xf32>
    %c0_39 = arith.constant 0 : index
    %c0_40 = arith.constant 0 : index
    %c0_41 = arith.constant 0 : index
    %c0_42 = arith.constant 0 : index
    %119 = vector.load %arg7[%c0_39, %c0_40, %c0_41, %c0_42] : memref<1x4x16x16xf32, #tpu.memory_space<vmem>>, vector<1x4x16x16xf32>
    %120 = vector.shape_cast %119 : vector<1x4x16x16xf32> to vector<4x16x16xf32>
    %121 = vector.shape_cast %118 : vector<4x16x16xf32> to vector<1x4x16x16xf32>
    tpu.vector_store %arg7[%c0_39, %c0_40, %c0_41, %c0_42], %121 {strides = array<i32>} : memref<1x4x16x16xf32, #tpu.memory_space<vmem>>, vector<1x4x16x16xf32>,
    %c0_43 = arith.constant 0 : index
    %c0_44 = arith.constant 0 : index
    %122 = vector.load %arg5[%c0_43, %c0_44] : memref<4x64xf32, #tpu.memory_space<vmem>>, vector<1x64xf32>
    %c1 = arith.constant 1 : index
    %c0_45 = arith.constant 0 : index
    %123 = vector.load %arg5[%c1, %c0_45] : memref<4x64xf32, #tpu.memory_space<vmem>>, vector<1x64xf32>
    %c2 = arith.constant 2 : index
    %c0_46 = arith.constant 0 : index
    %124 = vector.load %arg5[%c2, %c0_46] : memref<4x64xf32, #tpu.memory_space<vmem>>, vector<1x64xf32>
    %c3 = arith.constant 3 : index
    %c0_47 = arith.constant 0 : index
    %125 = vector.load %arg5[%c3, %c0_47] : memref<4x64xf32, #tpu.memory_space<vmem>>, vector<1x64xf32>
    %c0_48 = arith.constant 0 : index
    %c0_49 = arith.constant 0 : index
    %126 = vector.load %arg8[%c0_48, %c0_49] : memref<16x64xf32, #tpu.memory_space<vmem>>, vector<16x64xf32>
    %127 = vector.broadcast %122 : vector<1x64xf32> to vector<16x64xf32>
    %128 = arith.addf %126, %127 : vector<16x64xf32>
    %cst_50 = arith.constant dense<0.000000e+00> : vector<16xf32>
    %129 = vector.multi_reduction <add>, %128, %cst_50 [1] : vector<16x64xf32> to vector<16xf32>
    %130 = vector.shape_cast %129 : vector<16xf32> to vector<16x1xf32>
    %cst_51 = arith.constant 6.400000e+01 : f32
    %131 = vector.broadcast %cst_51 : f32 to vector<16x1xf32>
    %132 = arith.divf %130, %131 : vector<16x1xf32>
    %133 = vector.broadcast %132 : vector<16x1xf32> to vector<16x64xf32>
    %134 = arith.subf %128, %133 : vector<16x64xf32>
    %135 = arith.mulf %134, %134 : vector<16x64xf32>
    %cst_52 = arith.constant dense<0.000000e+00> : vector<16xf32>
    %136 = vector.multi_reduction <add>, %135, %cst_52 [1] : vector<16x64xf32> to vector<16xf32>
    %137 = vector.shape_cast %136 : vector<16xf32> to vector<16x1xf32>
    %cst_53 = arith.constant 6.400000e+01 : f32
    %138 = vector.broadcast %cst_53 : f32 to vector<16x1xf32>
    %139 = arith.divf %137, %138 : vector<16x1xf32>
    %140 = vector.broadcast %132 : vector<16x1xf32> to vector<16x64xf32>
    %141 = arith.subf %128, %140 : vector<16x64xf32>
    %cst_54 = arith.constant 9.99999974E-6 : f32
    %142 = vector.broadcast %cst_54 : f32 to vector<16x1xf32>
    %143 = arith.addf %139, %142 : vector<16x1xf32>
    %144 = math.rsqrt %143 : vector<16x1xf32>
    %145 = vector.broadcast %144 : vector<16x1xf32> to vector<16x64xf32>
    %146 = arith.mulf %141, %145 : vector<16x64xf32>
    %147 = vector.broadcast %123 : vector<1x64xf32> to vector<16x64xf32>
    %148 = arith.mulf %146, %147 : vector<16x64xf32>
    %149 = vector.broadcast %124 : vector<1x64xf32> to vector<16x64xf32>
    %150 = arith.addf %148, %149 : vector<16x64xf32>
    %cst_55 = arith.constant 0.000000e+00 : f32
    %151 = vector.broadcast %cst_55 : f32 to vector<16x64xf32>
    %152 = arith.cmpf ogt, %150, %151 : vector<16x64xf32>
    %153 = vector.broadcast %125 : vector<1x64xf32> to vector<16x64xf32>
    %154 = arith.mulf %153, %150 : vector<16x64xf32>
    %155 = arith.select %152, %150, %154 : vector<16x64xi1>, vector<16x64xf32>
    %c0_56 = arith.constant 0 : index
    %c0_57 = arith.constant 0 : index
    %c0_58 = arith.constant 0 : index
    %156 = vector.load %arg6[%c0_56, %c0_57, %c0_58] : memref<1x16x64xf32, #tpu.memory_space<vmem>>, vector<1x16x64xf32>
    %157 = vector.shape_cast %156 : vector<1x16x64xf32> to vector<16x64xf32>
    %158 = vector.shape_cast %155 : vector<16x64xf32> to vector<1x16x64xf32>
    tpu.vector_store %arg6[%c0_56, %c0_57, %c0_58], %158 {strides = array<i32>} : memref<1x16x64xf32, #tpu.memory_space<vmem>>, vector<1x16x64xf32>,
    return
  }
  func.func @transform_0(%arg0: i32) -> (i32, i32, i32) {
    %c0_i32 = arith.constant 0 : i32
    %c0_i32_0 = arith.constant 0 : i32
    %c0_i32_1 = arith.constant 0 : i32
    return %arg0, %c0_i32, %c0_i32_0 : i32, i32, i32
  }
  func.func @transform_1(%arg0: i32) -> (i32, i32) {
    %c0_i32 = arith.constant 0 : i32
    %c0_i32_0 = arith.constant 0 : i32
    %c0_i32_1 = arith.constant 0 : i32
    return %c0_i32, %c0_i32_0 : i32, i32
  }
  func.func @transform_2(%arg0: i32) -> (i32, i32) {
    %c0_i32 = arith.constant 0 : i32
    %c0_i32_0 = arith.constant 0 : i32
    %c0_i32_1 = arith.constant 0 : i32
    return %c0_i32, %c0_i32_0 : i32, i32
  }
  func.func @transform_3(%arg0: i32) -> (i32, i32, i32) {
    %c0_i32 = arith.constant 0 : i32
    %c0_i32_0 = arith.constant 0 : i32
    %c0_i32_1 = arith.constant 0 : i32
    return %arg0, %c0_i32, %c0_i32_0 : i32, i32, i32
  }
  func.func @transform_4(%arg0: i32) -> (i32, i32) {
    %c0_i32 = arith.constant 0 : i32
    %c0_i32_0 = arith.constant 0 : i32
    %c0_i32_1 = arith.constant 0 : i32
    return %c0_i32, %c0_i32_0 : i32, i32
  }
  func.func @transform_5(%arg0: i32) -> (i32, i32, i32) {
    %c0_i32 = arith.constant 0 : i32
    %c0_i32_0 = arith.constant 0 : i32
    %c0_i32_1 = arith.constant 0 : i32
    return %arg0, %c0_i32, %c0_i32_0 : i32, i32, i32
  }
  func.func @transform_6(%arg0: i32) -> (i32, i32, i32, i32) {
    %c0_i32 = arith.constant 0 : i32
    %c0_i32_0 = arith.constant 0 : i32
    %c0_i32_1 = arith.constant 0 : i32
    %c0_i32_2 = arith.constant 0 : i32
    return %arg0, %c0_i32, %c0_i32_0, %c0_i32_1 : i32, i32, i32, i32
  }
}

</mosaic_0001>

<llo_original>
// kernel: tpu_custom_call.1
$region0: #{tpu_custom_call.1}
  #allocation0 [shape = 'u32[]', space=smem, size = 0x4, offset = 0x4, fixed_abs, tag = 'smem constant byte address 0x4 - core index']
  #allocation1 [shape = 'u32[144,128]{1,0:T(1,128)}', space=vmem, size = 0x12000, scoped, tag = 'internal scratch']
  #allocation2 [shape = 'f32[16,64]{1,0:T(8,128)}', space=vmem, size = 0x2000, scoped, tag = 'scratch operand']
  %s0 = inlined_call_operand.vmem [shape: f32[4,16,32], index: 0, kind: input, shape index: {}]
  %s1 = inlined_call_operand.hbm [shape: f32[32,128], index: 1, kind: input, shape index: {}]
  %s2 = inlined_call_operand.vmem [shape: f32[128,8], index: 2, kind: input, shape index: {}]
  %s3 = inlined_call_operand.vmem [shape: f32[4,16,16], index: 3, kind: input, shape index: {}]
  %s4 = inlined_call_operand.vmem [shape: f32[4,64], index: 4, kind: input, shape index: {}]
  %s5 = inlined_call_operand.hbm [shape: f32[4,16,64], index: 5, kind: output, shape index: {0}]
  %s6 = inlined_call_operand.hbm [shape: f32[4,4,16,16], index: 6, kind: output, shape index: {1}]
  %7 = xla_tuple %s5, %s6
  %s8 = sld [smem:[#allocation0]]
  $region65: #{tpu_custom_call.1} parent=0
    _
  %s10 = ssub.s32 1, %s8
  %s11 = scalar_select 0, %s10, %s8
  $region1: #{tpu_custom_call.1} parent=0
    #allocation3 [shape = 'u8[16384]{0}', space=vmem, size = 0x4000, scoped, tag = 'input window, operand 1, single buffered']
    #allocation4 [shape = 's32[2]{0}', space=sflag, size = 0x8, scoped, tag = 'scoped memory for tpu_custom_call.1']
    #allocation5 [shape = 's32[2]{0}', space=sflag, size = 0x8, scoped, tag = 'scoped memory for tpu_custom_call.1']
    #allocation6 [shape = 'u8[16384]{0}', space=vmem, size = 0x4000, scoped, tag = 'output window, operand 0']
    #allocation7 [shape = 'u8[65536]{0}', space=vmem, size = 0x10000, scoped, tag = 'output window, operand 1']
    #allocation8 [shape = 's32[2]{0}', space=sflag, size = 0x8, scoped, tag = 'scoped memory for tpu_custom_call.1']
    %12 = vsyncpa [#allocation4], 0
    %13 = vsyncpa [#allocation5], 0
    %s14 = scalar_lea.sflag [#allocation5], 1
    %15 = vsyncpa %s14, 0
    %16 = vsyncpa [#allocation8], 0
    %s17 = scalar_lea.sflag [#allocation8], 1
    %18 = vsyncpa %s17, 0
    loop: start=0, step=1, limit=6
    $region2: #{tpu_custom_call.1} parent=1 // loop_pre_header
      _
    $region3: #{tpu_custom_call.1} parent=1 // loop_header
      %s20 = sphi 0, %s24
      %p21 = scmp.ge.s32.totalorder %s20, 6
      %s30 = sphi 0, %s32
      %s33 = sphi 0, %s30
      %s34 = sphi 0, %s33
      %s50 = sphi 0, %s34
      %s54 = sphi 0, %s54
      %s56 = sphi 0, %s54
      %s57 = sphi 0, %s56
      %s71 = sphi 0, %s57
      %s75 = sphi 0, %s75
      %s77 = sphi 0, %s75
      %s78 = sphi 0, %s77
      %s92 = sphi 0, %s78
      %s98 = sphi 0, %s100
      %s101 = sphi 0, %s98
      %s102 = sphi 0, %s101
      %s118 = sphi 0, %s102
      %s122 = sphi 0, %s122
      %s124 = sphi 0, %s122
      %s125 = sphi 0, %s124
      %s139 = sphi 0, %s125
      %s145 = sphi 0, %s147
      %s148 = sphi 0, %s145
      %s149 = sphi 0, %s148
      %s165 = sphi 0, %s149
      %s171 = sphi 0, %s173
      %s174 = sphi 0, %s171
      %s175 = sphi 0, %s174
      %s191 = sphi 0, %s175
    $region4: #{tpu_custom_call.1} parent=1 // loop_header_branch
      %23 = sbr.rel (%p21) target = $region8
    $region5: #{tpu_custom_call.1} parent=1 // loop_body
      %s25 = ssub.s32 %s20, 1
      %s26 = ssub.s32 %s20, 2
      %s27 = sadd.s32 %s20, 1
      %s28 = ssub.s32 %s20, %s27
      %p29 = scmp.eq.s32.totalorder %s28, 0
      %s31 = sadd.s32 %s30, 1
      %s32 = scalar_select %p29, %s30, %s31
      %p35 = pneg %p29
      %p36 = scmp.eq.s32.totalorder %s20, 3
      %p37 = por %p35, %p36
      %p38 = scmp.ne.s32.totalorder %s30, %s33
      %p39 = scmp.eq.s32.totalorder %s20, 0
      %p40 = por %p38, %p39
      %p41 = scmp.ne.s32.totalorder %s30, %s33
      %p42 = scmp.eq.s32.totalorder %s25, 3
      %p43 = por %p41, %p42
      %p44 = scmp.ne.s32.totalorder %s33, %s34
      %p45 = scmp.eq.s32.totalorder %s25, 0
      %p46 = por %p44, %p45
      %p47 = scmp.ne.s32.totalorder %s33, %s34
      %p48 = scmp.eq.s32.totalorder %s26, 3
      %p49 = por %p47, %p48
      %p51 = scmp.ne.s32.totalorder %s34, %s50
      %p52 = scmp.eq.s32.totalorder %s26, 0
      %p53 = por %p51, %p52
      %s55 = sadd.s32 %s54, 1
      %p58 = scmp.eq.s32.totalorder %s20, 3
      %p59 = scmp.ne.s32.totalorder %s54, %s56
      %p60 = scmp.eq.s32.totalorder %s20, 0
      %p61 = por %p59, %p60
      %p62 = scmp.ne.s32.totalorder %s54, %s56
      %p63 = scmp.eq.s32.totalorder %s25, 3
      %p64 = por %p62, %p63
      %p65 = scmp.ne.s32.totalorder %s56, %s57
      %p66 = scmp.eq.s32.totalorder %s25, 0
      %p67 = por %p65, %p66
      %p68 = scmp.ne.s32.totalorder %s56, %s57
      %p69 = scmp.eq.s32.totalorder %s26, 3
      %p70 = por %p68, %p69
      %p72 = scmp.ne.s32.totalorder %s57, %s71
      %p73 = scmp.eq.s32.totalorder %s26, 0
      %p74 = por %p72, %p73
      %s76 = sadd.s32 %s75, 1
      %p79 = scmp.eq.s32.totalorder %s20, 3
      %p80 = scmp.ne.s32.totalorder %s75, %s77
      %p81 = scmp.eq.s32.totalorder %s20, 0
      %p82 = por %p80, %p81
      %p83 = scmp.ne.s32.totalorder %s75, %s77
      %p84 = scmp.eq.s32.totalorder %s25, 3
      %p85 = por %p83, %p84
      %p86 = scmp.ne.s32.totalorder %s77, %s78
      %p87 = scmp.eq.s32.totalorder %s25, 0
      %p88 = por %p86, %p87
      %p89 = scmp.ne.s32.totalorder %s77, %s78
      %p90 = scmp.eq.s32.totalorder %s26, 3
      %p91 = por %p89, %p90
      %p93 = scmp.ne.s32.totalorder %s78, %s92
      %p94 = scmp.eq.s32.totalorder %s26, 0
      %p95 = por %p93, %p94
      %s96 = ssub.s32 %s20, %s27
      %p97 = scmp.eq.s32.totalorder %s96, 0
      %s99 = sadd.s32 %s98, 1
      %s100 = scalar_select %p97, %s98, %s99
      %p103 = pneg %p97
      %p104 = scmp.eq.s32.totalorder %s20, 3
      %p105 = por %p103, %p104
      %p106 = scmp.ne.s32.totalorder %s98, %s101
      %p107 = scmp.eq.s32.totalorder %s20, 0
      %p108 = por %p106, %p107
      %p109 = scmp.ne.s32.totalorder %s98, %s101
      %p110 = scmp.eq.s32.totalorder %s25, 3
      %p111 = por %p109, %p110
      %p112 = scmp.ne.s32.totalorder %s101, %s102
      %p113 = scmp.eq.s32.totalorder %s25, 0
      %p114 = por %p112, %p113
      %p115 = scmp.ne.s32.totalorder %s101, %s102
      %p116 = scmp.eq.s32.totalorder %s26, 3
      %p117 = por %p115, %p116
      %p119 = scmp.ne.s32.totalorder %s102, %s118
      %p120 = scmp.eq.s32.totalorder %s26, 0
      %p121 = por %p119, %p120
      %s123 = sadd.s32 %s122, 1
      %p126 = scmp.eq.s32.totalorder %s20, 3
      %p127 = scmp.ne.s32.totalorder %s122, %s124
      %p128 = scmp.eq.s32.totalorder %s20, 0
      %p129 = por %p127, %p128
      %p130 = scmp.ne.s32.totalorder %s122, %s124
      %p131 = scmp.eq.s32.totalorder %s25, 3
      %p132 = por %p130, %p131
      %p133 = scmp.ne.s32.totalorder %s124, %s125
      %p134 = scmp.eq.s32.totalorder %s25, 0
      %p135 = por %p133, %p134
      %p136 = scmp.ne.s32.totalorder %s124, %s125
      %p137 = scmp.eq.s32.totalorder %s26, 3
      %p138 = por %p136, %p137
      %p140 = scmp.ne.s32.totalorder %s125, %s139
      %p141 = scmp.eq.s32.totalorder %s26, 0
      %p142 = por %p140, %p141
      %s143 = ssub.s32 %s20, %s27
      %p144 = scmp.eq.s32.totalorder %s143, 0
      %s146 = sadd.s32 %s145, 1
      %s147 = scalar_select %p144, %s145, %s146
      %p150 = pneg %p144
      %p151 = scmp.eq.s32.totalorder %s20, 3
      %p152 = por %p150, %p151
      %p153 = scmp.ne.s32.totalorder %s145, %s148
      %p154 = scmp.eq.s32.totalorder %s20, 0
      %p155 = por %p153, %p154
      %p156 = scmp.ne.s32.totalorder %s145, %s148
      %p157 = scmp.eq.s32.totalorder %s25, 3
      %p158 = por %p156, %p157
      %p159 = scmp.ne.s32.totalorder %s148, %s149
      %p160 = scmp.eq.s32.totalorder %s25, 0
      %p161 = por %p159, %p160
      %p162 = scmp.ne.s32.totalorder %s148, %s149
      %p163 = scmp.eq.s32.totalorder %s26, 3
      %p164 = por %p162, %p163
      %p166 = scmp.ne.s32.totalorder %s149, %s165
      %p167 = scmp.eq.s32.totalorder %s26, 0
      %p168 = por %p166, %p167
      %s169 = ssub.s32 %s20, %s27
      %p170 = scmp.eq.s32.totalorder %s169, 0
      %s172 = sadd.s32 %s171, 1
      %s173 = scalar_select %p170, %s171, %s172
      %p176 = pneg %p170
      %p177 = scmp.eq.s32.totalorder %s20, 3
      %p178 = por %p176, %p177
      %p179 = scmp.ne.s32.totalorder %s171, %s174
      %p180 = scmp.eq.s32.totalorder %s20, 0
      %p181 = por %p179, %p180
      %p182 = scmp.ne.s32.totalorder %s171, %s174
      %p183 = scmp.eq.s32.totalorder %s25, 3
      %p184 = por %p182, %p183
      %p185 = scmp.ne.s32.totalorder %s174, %s175
      %p186 = scmp.eq.s32.totalorder %s25, 0
      %p187 = por %p185, %p186
      %p188 = scmp.ne.s32.totalorder %s174, %s175
      %p189 = scmp.eq.s32.totalorder %s26, 3
      %p190 = por %p188, %p189
      %p192 = scmp.ne.s32.totalorder %s175, %s191
      %p193 = scmp.eq.s32.totalorder %s26, 0
      %p194 = por %p192, %p193
      %p195 = scmp.le.s32.totalorder 1, %s20
      %p196 = scmp.lt.s32.totalorder %s20, 5
      %p197 = pnand %p195, %p196
      %p198 = pneg %p197
      // Predicated region
      $region9: #{tpu_custom_call.1} parent=5 // pred_check
        _
      $region10: #{tpu_custom_call.1} parent=5 // pred_check_branch
        %200 = sbr.rel (%p197) target = $region12
      $region11: #{tpu_custom_call.1} parent=5 // pred_region
        %s201 = ssub.s32 %s20, 1
        // Predicated region
        $region13: #{tpu_custom_call.1} parent=11 // pred_check
          %p202 = pneg %p67
        $region14: #{tpu_custom_call.1} parent=11 // pred_check_branch
          %204 = sbr.rel (%p202) target = $region16
        $region15: #{tpu_custom_call.1} parent=11 // pred_region
          %s206 = ssub.s32 512, 512
          %207 = vsyncadd [#allocation4], %s206
          %s208 = sshll.u32 [#allocation3], 4
          %s209 = int_to_ptr.vmem [resolvable:$true] %s208
          %214 = dma.hbm_to_vmem [thread:$0]  %s1, 512, %s209, [#allocation4], 128, 128, 8
        $region16: #{tpu_custom_call.1} parent=11 // pred_fallthru
          _
        // Predicated region
        $region17: #{tpu_custom_call.1} parent=11 // pred_check
          %p215 = pneg %p88
        $region18: #{tpu_custom_call.1} parent=11 // pred_check_branch
          %217 = sbr.rel (%p215) target = $region20
        $region19: #{tpu_custom_call.1} parent=11 // pred_region
          _
        $region20: #{tpu_custom_call.1} parent=11 // pred_fallthru
          _
        // Predicated region
        $region21: #{tpu_custom_call.1} parent=11 // pred_check
          %p218 = pneg %p135
        $region22: #{tpu_custom_call.1} parent=11 // pred_check_branch
          %220 = sbr.rel (%p218) target = $region24
        $region23: #{tpu_custom_call.1} parent=11 // pred_region
          _
        $region24: #{tpu_custom_call.1} parent=11 // pred_fallthru
          _
      $region12: #{tpu_custom_call.1} parent=5 // pred_fallthru
        _
      %p221 = scmp.lt.s32.totalorder %s20, 4
      // Predicated region
      $region25: #{tpu_custom_call.1} parent=5 // pred_check
        %p222 = pneg %p221
      $region26: #{tpu_custom_call.1} parent=5 // pred_check_branch
        %224 = sbr.rel (%p222) target = $region28
      $region27: #{tpu_custom_call.1} parent=5 // pred_region
        // Predicated region
        $region29: #{tpu_custom_call.1} parent=27 // pred_check
          %p225 = pneg %p40
        $region30: #{tpu_custom_call.1} parent=27 // pred_check_branch
          %227 = sbr.rel (%p225) target = $region32
        $region31: #{tpu_custom_call.1} parent=27 // pred_region
          %p228 = scmp.lt.s32.totalorder %s20, 3
          %s229 = scalar_select %p228, %s20, 3
          %s230 = smul.addr %s229, 2
          %s231 = smul.addr %s230, 8
          %s232 = scalar_lea.vmem %s0, %s231
        $region32: #{tpu_custom_call.1} parent=27 // pred_fallthru
          _
        // Predicated region
        $region33: #{tpu_custom_call.1} parent=27 // pred_check
          %p233 = pneg %p108
        $region34: #{tpu_custom_call.1} parent=27 // pred_check_branch
          %235 = sbr.rel (%p233) target = $region36
        $region35: #{tpu_custom_call.1} parent=27 // pred_region
          %p236 = scmp.lt.s32.totalorder %s20, 3
          %s237 = scalar_select %p236, %s20, 3
          %s238 = smul.addr %s237, 2
          %s239 = smul.addr %s238, 8
          %s240 = scalar_lea.vmem %s3, %s239
        $region36: #{tpu_custom_call.1} parent=27 // pred_fallthru
          _
      $region28: #{tpu_custom_call.1} parent=5 // pred_fallthru
        _
      %p241 = scmp.le.s32.totalorder 1, %s20
      %p242 = scmp.lt.s32.totalorder %s20, 5
      %p243 = pnand %p241, %p242
      %p244 = pneg %p243
      // Predicated region
      $region37: #{tpu_custom_call.1} parent=5 // pred_check
        _
      $region38: #{tpu_custom_call.1} parent=5 // pred_check_branch
        %246 = sbr.rel (%p243) target = $region40
      $region39: #{tpu_custom_call.1} parent=5 // pred_region
        %s247 = ssub.s32 %s20, 1
        // Predicated region
        $region41: #{tpu_custom_call.1} parent=39 // pred_check
          %p248 = pneg %p67
        $region42: #{tpu_custom_call.1} parent=39 // pred_check_branch
          %250 = sbr.rel (%p248) target = $region44
        $region43: #{tpu_custom_call.1} parent=39 // pred_region
          %251 = dma.done [#allocation4], 512
        $region44: #{tpu_custom_call.1} parent=39 // pred_fallthru
          _
        %p252 = scmp.lt.s32.totalorder %s25, 3
        %s253 = scalar_select %p252, %s25, 3
        %s254 = smul.addr %s253, 2
        %s255 = smul.addr %s254, 8
        %s256 = scalar_lea.vmem %s0, %s255
        %p257 = pneg %p46
        %p258 = pneg %p43
        %p259 = pneg %p67
        %p260 = pneg %p64
        %p261 = pneg %p88
        %p262 = pneg %p85
        %p263 = scmp.lt.s32.totalorder %s25, 3
        %s264 = scalar_select %p263, %s25, 3
        %s265 = smul.addr %s264, 2
        %s266 = smul.addr %s265, 8
        %s267 = scalar_lea.vmem %s3, %s266
        %p268 = pneg %p114
        %p269 = pneg %p111
        %p270 = pneg %p135
        %p271 = pneg %p132
        %p272 = pneg %p161
        %p273 = pneg %p158
        %s274 = sand.u32 %s148, 1
        %s275 = scalar_lea.sflag [#allocation5], %s274
        %s276 = sand.u32 %s148, 1
        %s277 = smul.addr %s276, 16
        %s278 = scalar_lea.vmem [#allocation6], %s277
        %p279 = pneg %p187
        %p280 = pneg %p184
        %s281 = sand.u32 %s174, 1
        %s282 = scalar_lea.sflag [#allocation8], %s281
        %s283 = sand.u32 %s174, 1
        %s284 = smul.addr %s283, 64
        %s285 = scalar_lea.vmem [#allocation7], %s284
        %p286 = scmp.lt.s32.totalorder %s25, 3
        %s287 = scalar_select %p286, %s25, 3
        %s288 = smul.addr %s287, 2
        %s289 = smul.addr %s288, 8
        %s290 = scalar_lea.vmem %s0, %s289
        %p291 = scmp.lt.s32.totalorder %s25, 3
        %s292 = scalar_select %p291, %s25, 3
        %s293 = smul.addr %s292, 2
        %s294 = smul.addr %s293, 8
        %s295 = scalar_lea.vmem %s3, %s294
        %v296 = vld [vmem:[%s290] sm:$0xff]
        %v297 = vld [vmem:[%s290 + $0x8] sm:$0xff]
        %v298 = vld [vmem:[%s295] sm:$0xff]
        %v299 = vld [vmem:[%s295 + $0x8] sm:$0xff]
        %v300 = vld [vmem:[#allocation3] sm:$0xff]
        %v301 = vld [vmem:[#allocation3 + $0x8] sm:$0xff]
        %v302 = vld [vmem:[#allocation3 + $0x10] sm:$0xff]
        %v303 = vld [vmem:[#allocation3 + $0x18] sm:$0xff]
        %vm304 = vcmask 261120
        %v306 = vsel %vm304, %v296, 0
        %v309 = vsel %vm304, %v297, 0
        %311 = vmatprep.subr.mxu0 0.0
        %312 = vmatpush1.msra.mxu0 %v300
        %313 = vmatprep.subr.mxu0 0.0
        %314 = vmatpush1.msra.mxu0 %v301
        %315 = vmatprep.subr.mxu0 0.0
        %316 = vmatpush1.msra.mxu0 %v302
        %317 = vmatprep.subr.mxu0 0.0
        %318 = vmatpush1.msra.mxu0 %v303
        %319 = vmatprep.subr.mxu0 0.0
        %320 = vmatpush1.msra.mxu0 0.0
        %321 = vmatprep.subr.mxu0 0.0
        %322 = vmatpush1.msra.mxu0 0.0
        %323 = vmatprep.subr.mxu0 0.0
        %324 = vmatpush1.msra.mxu0 0.0
        %325 = vmatprep.subr.mxu0 0.0
        %326 = vmatpush1.msra.mxu0 0.0
        %327 = vmatprep.subr.mxu0 0.0
        %328 = vmatpush1.msra.mxu0 0.0
        %329 = vmatprep.subr.mxu0 0.0
        %330 = vmatpush1.msra.mxu0 0.0
        %331 = vmatprep.subr.mxu0 0.0
        %332 = vmatpush1.msra.mxu0 0.0
        %333 = vmatprep.subr.mxu0 0.0
        %334 = vmatpush1.msra.mxu0 0.0
        %335 = vmatprep.subr.mxu0 0.0
        %336 = vmatpush1.msra.mxu0 0.0
        %337 = vmatprep.subr.mxu0 0.0
        %338 = vmatpush1.msra.mxu0 0.0
        %339 = vmatprep.subr.mxu0 0.0
        %340 = vmatpush1.msra.mxu0 0.0
        %341 = vmatprep.subr.mxu0 0.0
        %342 = vmatpush1.msra.mxu0 0.0
        %343 = vmatprep.subr.mxu0 0.0
        %344 = vmatpush1.msra.mxu0 0.0
        %345 = vmatprep.subr.mxu0 0.0
        %346 = vmatpush1.msra.mxu0 0.0
        %347 = vmatprep.subr.mxu0 0.0
        %348 = vmatpush1.msra.mxu0 0.0
        %349 = vmatprep.subr.mxu0 0.0
        %350 = vmatpush1.msra.mxu0 0.0
        %351 = vmatprep.subr.mxu0 0.0
        %352 = vmatpush1.msra.mxu0 0.0
        %353 = vmatprep.subr.mxu0 0.0
        %354 = vmatpush1.msra.mxu0 0.0
        %355 = vmatprep.subr.mxu0 0.0
        %356 = vmatpush1.msra.mxu0 0.0
        %357 = vmatprep.subr.mxu0 0.0
        %358 = vmatpush1.msra.mxu0 0.0
        %359 = vmatprep.subr.mxu0 0.0
        %360 = vmatpush1.msra.mxu0 0.0
        %361 = vmatprep.subr.mxu0 0.0
        %362 = vmatpush1.msra.mxu0 0.0
        %363 = vmatprep.subr.mxu0 0.0
        %364 = vmatpush1.msra.mxu0 0.0
        %365 = vmatprep.subr.mxu0 0.0
        %366 = vmatpush1.msra.mxu0 0.0
        %367 = vmatprep.subr.mxu0 0.0
        %368 = vmatpush1.msra.mxu0 0.0
        %369 = vmatprep.subr.mxu0 0.0
        %370 = vmatpush1.msra.mxu0 0.0
        %371 = vmatprep.subr.mxu0 0.0
        %372 = vmatpush1.msra.mxu0 0.0
        %373 = vmatprep.subr.mxu0 0.0
        %374 = vmatpush1.msra.mxu0 0.0
        %375 = vmatprep.mubr.f32.mxu0 0.0
        %376 = vmatmul.mubr.f32.gmra.mrb[0].mxu0 %v306
        %v377 = vpop.f32.mrb[0].mxu0
        %v378 = vadd.f32 0.0, %v377
        %v379 = vpop.f32.mrb[0].mxu0
        %380 = vmatprep.mubr.f32.mxu0 0.0
        %381 = vmatmul.mubr.f32.gmra.mrb[0].mxu0 %v309
        %v382 = vpop.f32.mrb[0].mxu0
        %v383 = vadd.f32 0.0, %v382
        %v384 = vpop.f32.mrb[0].mxu0
        %385 = vdwg.mxu0
        %v386 = vld [vmem:[%s2] sm:$0xff]
        %v387 = vld [vmem:[%s2 + $0x8] sm:$0xff]
        %v388 = vld [vmem:[%s2 + $0x10] sm:$0xff]
        %v389 = vld [vmem:[%s2 + $0x18] sm:$0xff]
        %v390 = vld [vmem:[%s2 + $0x20] sm:$0xff]
        %v391 = vld [vmem:[%s2 + $0x28] sm:$0xff]
        %v392 = vld [vmem:[%s2 + $0x30] sm:$0xff]
        %v393 = vld [vmem:[%s2 + $0x38] sm:$0xff]
        %v394 = vld [vmem:[%s2 + $0x40] sm:$0xff]
        %v395 = vld [vmem:[%s2 + $0x48] sm:$0xff]
        %v396 = vld [vmem:[%s2 + $0x50] sm:$0xff]
        %v397 = vld [vmem:[%s2 + $0x58] sm:$0xff]
        %v398 = vld [vmem:[%s2 + $0x60] sm:$0xff]
        %v399 = vld [vmem:[%s2 + $0x68] sm:$0xff]
        %v400 = vld [vmem:[%s2 + $0x70] sm:$0xff]
        %v401 = vld [vmem:[%s2 + $0x78] sm:$0xff]
        %402 = vmatprep.subr.mxu0 0.0
        %403 = vmatpush1.msra.mxu0 %v386
        %404 = vmatprep.subr.mxu0 0.0
        %405 = vmatpush1.msra.mxu0 %v387
        %406 = vmatprep.subr.mxu0 0.0
        %407 = vmatpush1.msra.mxu0 %v388
        %408 = vmatprep.subr.mxu0 0.0
        %409 = vmatpush1.msra.mxu0 %v389
        %410 = vmatprep.subr.mxu0 0.0
        %411 = vmatpush1.msra.mxu0 %v390
        %412 = vmatprep.subr.mxu0 0.0
        %413 = vmatpush1.msra.mxu0 %v391
        %414 = vmatprep.subr.mxu0 0.0
        %415 = vmatpush1.msra.mxu0 %v392
        %416 = vmatprep.subr.mxu0 0.0
        %417 = vmatpush1.msra.mxu0 %v393
        %418 = vmatprep.subr.mxu0 0.0
        %419 = vmatpush1.msra.mxu0 %v394
        %420 = vmatprep.subr.mxu0 0.0
        %421 = vmatpush1.msra.mxu0 %v395
        %422 = vmatprep.subr.mxu0 0.0
        %423 = vmatpush1.msra.mxu0 %v396
        %424 = vmatprep.subr.mxu0 0.0
        %425 = vmatpush1.msra.mxu0 %v397
        %426 = vmatprep.subr.mxu0 0.0
        %427 = vmatpush1.msra.mxu0 %v398
        %428 = vmatprep.subr.mxu0 0.0
        %429 = vmatpush1.msra.mxu0 %v399
        %430 = vmatprep.subr.mxu0 0.0
        %431 = vmatpush1.msra.mxu0 %v400
        %432 = vmatprep.subr.mxu0 0.0
        %433 = vmatpush1.msra.mxu0 %v401
        %434 = vmatprep.subr.mxu0 0.0
        %435 = vmatpush1.msra.mxu0 0.0
        %436 = vmatprep.subr.mxu0 0.0
        %437 = vmatpush1.msra.mxu0 0.0
        %438 = vmatprep.subr.mxu0 0.0
        %439 = vmatpush1.msra.mxu0 0.0
        %440 = vmatprep.subr.mxu0 0.0
        %441 = vmatpush1.msra.mxu0 0.0
        %442 = vmatprep.subr.mxu0 0.0
        %443 = vmatpush1.msra.mxu0 0.0
        %444 = vmatprep.subr.mxu0 0.0
        %445 = vmatpush1.msra.mxu0 0.0
        %446 = vmatprep.subr.mxu0 0.0
        %447 = vmatpush1.msra.mxu0 0.0
        %448 = vmatprep.subr.mxu0 0.0
        %449 = vmatpush1.msra.mxu0 0.0
        %450 = vmatprep.subr.mxu0 0.0
        %451 = vmatpush1.msra.mxu0 0.0
        %452 = vmatprep.subr.mxu0 0.0
        %453 = vmatpush1.msra.mxu0 0.0
        %454 = vmatprep.subr.mxu0 0.0
        %455 = vmatpush1.msra.mxu0 0.0
        %456 = vmatprep.subr.mxu0 0.0
        %457 = vmatpush1.msra.mxu0 0.0
        %458 = vmatprep.subr.mxu0 0.0
        %459 = vmatpush1.msra.mxu0 0.0
        %460 = vmatprep.subr.mxu0 0.0
        %461 = vmatpush1.msra.mxu0 0.0
        %462 = vmatprep.subr.mxu0 0.0
        %463 = vmatpush1.msra.mxu0 0.0
        %464 = vmatprep.subr.mxu0 0.0
        %465 = vmatpush1.msra.mxu0 0.0
        %466 = vmatprep.mubr.f32.mxu0 0.0
        %467 = vmatmul.mubr.f32.gmra.mrb[0].mxu0 %v378
        %v468 = vpop.f32.mrb[0].mxu0
        %v469 = vadd.f32 0.0, %v468
        %v470 = vpop.f32.mrb[0].mxu0
        %471 = vmatprep.mubr.f32.mxu0 0.0
        %472 = vmatmul.mubr.f32.gmra.mrb[0].mxu0 %v383
        %v473 = vpop.f32.mrb[0].mxu0
        %v474 = vadd.f32 0.0, %v473
        %v475 = vpop.f32.mrb[0].mxu0
        %476 = vdwg.mxu0
        %477 = vxpose.xlu0.b32.start [1/16] %v469, 128
        %478 = vxpose.xlu0.b32.cont [2/16] %v474, 128
        %479 = vxpose.xlu0.b32.cont [3/16] 0.0, 128
        %480 = vxpose.xlu0.b32.cont [4/16] 0.0, 128
        %481 = vxpose.xlu0.b32.cont [5/16] 0.0, 128
        %482 = vxpose.xlu0.b32.cont [6/16] 0.0, 128
        %483 = vxpose.xlu0.b32.cont [7/16] 0.0, 128
        %484 = vxpose.xlu0.b32.cont [8/16] 0.0, 128
        %485 = vxpose.xlu0.b32.cont [9/16] 0.0, 128
        %486 = vxpose.xlu0.b32.cont [10/16] 0.0, 128
        %487 = vxpose.xlu0.b32.cont [11/16] 0.0, 128
        %488 = vxpose.xlu0.b32.cont [12/16] 0.0, 128
        %489 = vxpose.xlu0.b32.cont [13/16] 0.0, 128
        %490 = vxpose.xlu0.b32.cont [14/16] 0.0, 128
        %491 = vxpose.xlu0.b32.cont [15/16] 0.0, 128
        %492 = vxpose.xlu0.b32.end [16/16] 0.0, 128
        %v493 = vpop.trf.xlu0
        %v494 = vpop.trf.xlu0
        %v495 = vpop.trf.xlu0
        %v496 = vpop.trf.xlu0
        %v497 = vpop.trf.xlu0
        %v498 = vpop.trf.xlu0
        %v499 = vpop.trf.xlu0
        %v500 = vpop.trf.xlu0
        %v501 = vpop.trf.xlu0
        %v502 = vpop.trf.xlu0
        %v503 = vpop.trf.xlu0
        %v504 = vpop.trf.xlu0
        %v505 = vpop.trf.xlu0
        %v506 = vpop.trf.xlu0
        %v507 = vpop.trf.xlu0
        %v508 = vpop.trf.xlu0
        %510 = vset.pattern.permute.xlu0 4
        %511 = vperm.xlu0 %510, %v469
        %v512 = vpop.permute.xlu0 %511
        %515 = vset.pattern.permute.xlu0 4
        %516 = vperm.xlu0 %515, %v474
        %v517 = vpop.permute.xlu0 %516
        %v519 = vlaneseq
        %v520 = vshrl.u32 %v519, 7
        %v521 = vsub.s32 0, %v520
        %v522 = vrot.slane %v493, %v521
        %v523 = vadd.f32 %v512, %v522
        %v524 = vadd.f32 %v517, %v522
        %vm525 = vcmp.gt.f32.partialorder %v523, 0.0
        %vm526 = vcmp.gt.f32.partialorder %v524, 0.0
        %v527 = vmul.f32 %v523, 0.2
        %v528 = vmul.f32 %v524, 0.2
        %v529 = vsel %vm525, %v523, %v527
        %v530 = vsel %vm526, %v524, %v528
        %vm531 = vcmask 130048
        %v532 = vsel %vm531, %v529, -inf
        %533 = vmax.xlane.f32.xlu0 %v532
        %v534 = vpop.xlane.xlu0 %533
        %v535 = vsel %vm531, %v530, -inf
        %536 = vmax.xlane.f32.xlu0 %v535
        %v537 = vpop.xlane.xlu0 %536
        %v538 = vsub.f32 %v529, %v534
        %v539 = vsub.f32 %v530, %v537
        %v540 = vmul.f32 %v538, 1.442695
        %v541 = vpow.pop %v540
        %v542 = vmul.f32 %v539, 1.442695
        %v543 = vpow.pop %v542
        %v544 = vmul.f32 %v541, %v298
        %v545 = vmul.f32 %v543, %v299
        %v546 = vsel %vm531, %v544, 0.0
        %547 = vadd.xlane.f32.xlu0 %v546
        %v548 = vpop.xlane.xlu0 %547
        %v549 = vsel %vm531, %v545, 0.0
        %550 = vadd.xlane.f32.xlu0 %v549
        %v551 = vpop.xlane.xlu0 %550
        %v552 = vmax.f32 %v548, 1e-16
        %v553 = vmax.f32 %v551, 1e-16
        %v554 = vrcp.pop %v552
        %v555 = vrcp.pop %v553
        %v556 = vmul.f32 %v544, %v554
        %v557 = vmul.f32 %v545, %v555
        %v559 = vsel %vm531, %v556, 0
        %v562 = vsel %vm531, %v557, 0
        %564 = vmatprep.subr.mxu0 0.0
        %565 = vmatpush1.msra.mxu0 %v378
        %566 = vmatprep.subr.mxu0 0.0
        %567 = vmatpush1.msra.mxu0 %v383
        %568 = vmatprep.subr.mxu0 0.0
        %569 = vmatpush1.msra.mxu0 0.0
        %570 = vmatprep.subr.mxu0 0.0
        %571 = vmatpush1.msra.mxu0 0.0
        %572 = vmatprep.subr.mxu0 0.0
        %573 = vmatpush1.msra.mxu0 0.0
        %574 = vmatprep.subr.mxu0 0.0
        %575 = vmatpush1.msra.mxu0 0.0
        %576 = vmatprep.subr.mxu0 0.0
        %577 = vmatpush1.msra.mxu0 0.0
        %578 = vmatprep.subr.mxu0 0.0
        %579 = vmatpush1.msra.mxu0 0.0
        %580 = vmatprep.subr.mxu0 0.0
        %581 = vmatpush1.msra.mxu0 0.0
        %582 = vmatprep.subr.mxu0 0.0
        %583 = vmatpush1.msra.mxu0 0.0
        %584 = vmatprep.subr.mxu0 0.0
        %585 = vmatpush1.msra.mxu0 0.0
        %586 = vmatprep.subr.mxu0 0.0
        %587 = vmatpush1.msra.mxu0 0.0
        %588 = vmatprep.subr.mxu0 0.0
        %589 = vmatpush1.msra.mxu0 0.0
        %590 = vmatprep.subr.mxu0 0.0
        %591 = vmatpush1.msra.mxu0 0.0
        %592 = vmatprep.subr.mxu0 0.0
        %593 = vmatpush1.msra.mxu0 0.0
        %594 = vmatprep.subr.mxu0 0.0
        %595 = vmatpush1.msra.mxu0 0.0
        %596 = vmatprep.subr.mxu0 0.0
        %597 = vmatpush1.msra.mxu0 0.0
        %598 = vmatprep.subr.mxu0 0.0
        %599 = vmatpush1.msra.mxu0 0.0
        %600 = vmatprep.subr.mxu0 0.0
        %601 = vmatpush1.msra.mxu0 0.0
        %602 = vmatprep.subr.mxu0 0.0
        %603 = vmatpush1.msra.mxu0 0.0
        %604 = vmatprep.subr.mxu0 0.0
        %605 = vmatpush1.msra.mxu0 0.0
        %606 = vmatprep.subr.mxu0 0.0
        %607 = vmatpush1.msra.mxu0 0.0
        %608 = vmatprep.subr.mxu0 0.0
        %609 = vmatpush1.msra.mxu0 0.0
        %610 = vmatprep.subr.mxu0 0.0
        %611 = vmatpush1.msra.mxu0 0.0
        %612 = vmatprep.subr.mxu0 0.0
        %613 = vmatpush1.msra.mxu0 0.0
        %614 = vmatprep.subr.mxu0 0.0
        %615 = vmatpush1.msra.mxu0 0.0
        %616 = vmatprep.subr.mxu0 0.0
        %617 = vmatpush1.msra.mxu0 0.0
        %618 = vmatprep.subr.mxu0 0.0
        %619 = vmatpush1.msra.mxu0 0.0
        %620 = vmatprep.subr.mxu0 0.0
        %621 = vmatpush1.msra.mxu0 0.0
        %622 = vmatprep.subr.mxu0 0.0
        %623 = vmatpush1.msra.mxu0 0.0
        %624 = vmatprep.subr.mxu0 0.0
        %625 = vmatpush1.msra.mxu0 0.0
        %626 = vmatprep.subr.mxu0 0.0
        %627 = vmatpush1.msra.mxu0 0.0
        %628 = vmatprep.mubr.f32.mxu0 0.0
        %629 = vmatmul.mubr.f32.gmra.mrb[0].mxu0 %v559
        %v630 = vpop.f32.mrb[0].mxu0
        %v631 = vadd.f32 0.0, %v630
        %v632 = vpop.f32.mrb[0].mxu0
        %633 = vmatprep.mubr.f32.mxu0 0.0
        %634 = vmatmul.mubr.f32.gmra.mrb[0].mxu0 %v562
        %v635 = vpop.f32.mrb[0].mxu0
        %v636 = vadd.f32 0.0, %v635
        %v637 = vpop.f32.mrb[0].mxu0
        %638 = vdwg.mxu0
        %639 = vst.msk [vmem:[#allocation2] sm:$0xff] %vm531, %v631
        %640 = vst.msk [vmem:[#allocation2 + $0x8] sm:$0xff] %vm531, %v636
        %641 = vset.pattern.permute.xlu0 5
        %642 = vperm.xlu0 %641, %v469
        %v643 = vpop.permute.xlu0 %642
        %645 = vset.pattern.permute.xlu0 5
        %646 = vperm.xlu0 %645, %v474
        %v647 = vpop.permute.xlu0 %646
        %v649 = vlaneseq
        %v650 = vshrl.u32 %v649, 7
        %v651 = vsub.s32 1, %v650
        %v652 = vrot.slane %v493, %v651
        %v653 = vadd.f32 %v643, %v652
        %v654 = vadd.f32 %v647, %v652
        %vm655 = vcmp.gt.f32.partialorder %v653, 0.0
        %vm656 = vcmp.gt.f32.partialorder %v654, 0.0
        %v657 = vmul.f32 %v653, 0.2
        %v658 = vmul.f32 %v654, 0.2
        %v659 = vsel %vm655, %v653, %v657
        %v660 = vsel %vm656, %v654, %v658
        %v661 = vsel %vm531, %v659, -inf
        %662 = vmax.xlane.f32.xlu0 %v661
        %v663 = vpop.xlane.xlu0 %662
        %v664 = vsel %vm531, %v660, -inf
        %665 = vmax.xlane.f32.xlu0 %v664
        %v666 = vpop.xlane.xlu0 %665
        %v667 = vsub.f32 %v659, %v663
        %v668 = vsub.f32 %v660, %v666
        %v669 = vmul.f32 %v667, 1.442695
        %v670 = vpow.pop %v669
        %v671 = vmul.f32 %v668, 1.442695
        %v672 = vpow.pop %v671
        %v673 = vmul.f32 %v670, %v298
        %v674 = vmul.f32 %v672, %v299
        %v675 = vsel %vm531, %v673, 0.0
        %676 = vadd.xlane.f32.xlu0 %v675
        %v677 = vpop.xlane.xlu0 %676
        %v678 = vsel %vm531, %v674, 0.0
        %679 = vadd.xlane.f32.xlu0 %v678
        %v680 = vpop.xlane.xlu0 %679
        %v681 = vmax.f32 %v677, 1e-16
        %v682 = vmax.f32 %v680, 1e-16
        %v683 = vrcp.pop %v681
        %v684 = vrcp.pop %v682
        %v685 = vmul.f32 %v673, %v683
        %v686 = vmul.f32 %v674, %v684
        %689 = vrot.lane.b32.xlu0 %v378, 112
        %v690 = vpop.permute.xlu0 %689
        %691 = vrot.lane.b32.xlu0 %v383, 112
        %v692 = vpop.permute.xlu0 %691
        %v696 = vsel %vm531, %v685, 0
        %v699 = vsel %vm531, %v686, 0
        %701 = vmatprep.subr.mxu0 0.0
        %702 = vmatpush1.msra.mxu0 %v690
        %703 = vmatprep.subr.mxu0 0.0
        %704 = vmatpush1.msra.mxu0 %v692
        %705 = vmatprep.subr.mxu0 0.0
        %706 = vmatpush1.msra.mxu0 0.0
        %707 = vmatprep.subr.mxu0 0.0
        %708 = vmatpush1.msra.mxu0 0.0
        %709 = vmatprep.subr.mxu0 0.0
        %710 = vmatpush1.msra.mxu0 0.0
        %711 = vmatprep.subr.mxu0 0.0
        %712 = vmatpush1.msra.mxu0 0.0
        %713 = vmatprep.subr.mxu0 0.0
        %714 = vmatpush1.msra.mxu0 0.0
        %715 = vmatprep.subr.mxu0 0.0
        %716 = vmatpush1.msra.mxu0 0.0
        %717 = vmatprep.subr.mxu0 0.0
        %718 = vmatpush1.msra.mxu0 0.0
        %719 = vmatprep.subr.mxu0 0.0
        %720 = vmatpush1.msra.mxu0 0.0
        %721 = vmatprep.subr.mxu0 0.0
        %722 = vmatpush1.msra.mxu0 0.0
        %723 = vmatprep.subr.mxu0 0.0
        %724 = vmatpush1.msra.mxu0 0.0
        %725 = vmatprep.subr.mxu0 0.0
        %726 = vmatpush1.msra.mxu0 0.0
        %727 = vmatprep.subr.mxu0 0.0
        %728 = vmatpush1.msra.mxu0 0.0
        %729 = vmatprep.subr.mxu0 0.0
        %730 = vmatpush1.msra.mxu0 0.0
        %731 = vmatprep.subr.mxu0 0.0
        %732 = vmatpush1.msra.mxu0 0.0
        %733 = vmatprep.subr.mxu0 0.0
        %734 = vmatpush1.msra.mxu0 0.0
        %735 = vmatprep.subr.mxu0 0.0
        %736 = vmatpush1.msra.mxu0 0.0
        %737 = vmatprep.subr.mxu0 0.0
        %738 = vmatpush1.msra.mxu0 0.0
        %739 = vmatprep.subr.mxu0 0.0
        %740 = vmatpush1.msra.mxu0 0.0
        %741 = vmatprep.subr.mxu0 0.0
        %742 = vmatpush1.msra.mxu0 0.0
        %743 = vmatprep.subr.mxu0 0.0
        %744 = vmatpush1.msra.mxu0 0.0
        %745 = vmatprep.subr.mxu0 0.0
        %746 = vmatpush1.msra.mxu0 0.0
        %747 = vmatprep.subr.mxu0 0.0
        %748 = vmatpush1.msra.mxu0 0.0
        %749 = vmatprep.subr.mxu0 0.0
        %750 = vmatpush1.msra.mxu0 0.0
        %751 = vmatprep.subr.mxu0 0.0
        %752 = vmatpush1.msra.mxu0 0.0
        %753 = vmatprep.subr.mxu0 0.0
        %754 = vmatpush1.msra.mxu0 0.0
        %755 = vmatprep.subr.mxu0 0.0
        %756 = vmatpush1.msra.mxu0 0.0
        %757 = vmatprep.subr.mxu0 0.0
        %758 = vmatpush1.msra.mxu0 0.0
        %759 = vmatprep.subr.mxu0 0.0
        %760 = vmatpush1.msra.mxu0 0.0
        %761 = vmatprep.subr.mxu0 0.0
        %762 = vmatpush1.msra.mxu0 0.0
        %763 = vmatprep.subr.mxu0 0.0
        %764 = vmatpush1.msra.mxu0 0.0
        %765 = vmatprep.mubr.f32.mxu0 0.0
        %766 = vmatmul.mubr.f32.gmra.mrb[0].mxu0 %v696
        %v767 = vpop.f32.mrb[0].mxu0
        %v768 = vadd.f32 0.0, %v767
        %v769 = vpop.f32.mrb[0].mxu0
        %770 = vmatprep.mubr.f32.mxu0 0.0
        %771 = vmatmul.mubr.f32.gmra.mrb[0].mxu0 %v699
        %v772 = vpop.f32.mrb[0].mxu0
        %v773 = vadd.f32 0.0, %v772
        %v774 = vpop.f32.mrb[0].mxu0
        %775 = vdwg.mxu0
        %778 = vrot.lane.b32.xlu0 %v768, 16
        %v779 = vpop.permute.xlu0 %778
        %780 = vrot.lane.b32.xlu0 %v773, 16
        %v781 = vpop.permute.xlu0 %780
        %vm784 = vcmask 261248
        %785 = vst.msk [vmem:[#allocation2] sm:$0xff] %vm784, %v779
        %786 = vst.msk [vmem:[#allocation2 + $0x8] sm:$0xff] %vm784, %v781
        %787 = vset.pattern.permute.xlu0 6
        %788 = vperm.xlu0 %787, %v469
        %v789 = vpop.permute.xlu0 %788
        %791 = vset.pattern.permute.xlu0 6
        %792 = vperm.xlu0 %791, %v474
        %v793 = vpop.permute.xlu0 %792
        %v795 = vlaneseq
        %v796 = vshrl.u32 %v795, 7
        %v797 = vsub.s32 2, %v796
        %v798 = vrot.slane %v493, %v797
        %v799 = vadd.f32 %v789, %v798
        %v800 = vadd.f32 %v793, %v798
        %vm801 = vcmp.gt.f32.partialorder %v799, 0.0
        %vm802 = vcmp.gt.f32.partialorder %v800, 0.0
        %v803 = vmul.f32 %v799, 0.2
        %v804 = vmul.f32 %v800, 0.2
        %v805 = vsel %vm801, %v799, %v803
        %v806 = vsel %vm802, %v800, %v804
        %v807 = vsel %vm531, %v805, -inf
        %808 = vmax.xlane.f32.xlu0 %v807
        %v809 = vpop.xlane.xlu0 %808
        %v810 = vsel %vm531, %v806, -inf
        %811 = vmax.xlane.f32.xlu0 %v810
        %v812 = vpop.xlane.xlu0 %811
        %v813 = vsub.f32 %v805, %v809
        %v814 = vsub.f32 %v806, %v812
        %v815 = vmul.f32 %v813, 1.442695
        %v816 = vpow.pop %v815
        %v817 = vmul.f32 %v814, 1.442695
        %v818 = vpow.pop %v817
        %v819 = vmul.f32 %v816, %v298
        %v820 = vmul.f32 %v818, %v299
        %v821 = vsel %vm531, %v819, 0.0
        %822 = vadd.xlane.f32.xlu0 %v821
        %v823 = vpop.xlane.xlu0 %822
        %v824 = vsel %vm531, %v820, 0.0
        %825 = vadd.xlane.f32.xlu0 %v824
        %v826 = vpop.xlane.xlu0 %825
        %v827 = vmax.f32 %v823, 1e-16
        %v828 = vmax.f32 %v826, 1e-16
        %v829 = vrcp.pop %v827
        %v830 = vrcp.pop %v828
        %v831 = vmul.f32 %v819, %v829
        %v832 = vmul.f32 %v820, %v830
        %833 = vrot.lane.b32.xlu0 %v378, 96
        %v834 = vpop.permute.xlu0 %833
        %835 = vrot.lane.b32.xlu0 %v383, 96
        %v836 = vpop.permute.xlu0 %835
        %v840 = vsel %vm531, %v831, 0
        %v843 = vsel %vm531, %v832, 0
        %845 = vmatprep.subr.mxu0 0.0
        %846 = vmatpush1.msra.mxu0 %v834
        %847 = vmatprep.subr.mxu0 0.0
        %848 = vmatpush1.msra.mxu0 %v836
        %849 = vmatprep.subr.mxu0 0.0
        %850 = vmatpush1.msra.mxu0 0.0
        %851 = vmatprep.subr.mxu0 0.0
        %852 = vmatpush1.msra.mxu0 0.0
        %853 = vmatprep.subr.mxu0 0.0
        %854 = vmatpush1.msra.mxu0 0.0
        %855 = vmatprep.subr.mxu0 0.0
        %856 = vmatpush1.msra.mxu0 0.0
        %857 = vmatprep.subr.mxu0 0.0
        %858 = vmatpush1.msra.mxu0 0.0
        %859 = vmatprep.subr.mxu0 0.0
        %860 = vmatpush1.msra.mxu0 0.0
        %861 = vmatprep.subr.mxu0 0.0
        %862 = vmatpush1.msra.mxu0 0.0
        %863 = vmatprep.subr.mxu0 0.0
        %864 = vmatpush1.msra.mxu0 0.0
        %865 = vmatprep.subr.mxu0 0.0
        %866 = vmatpush1.msra.mxu0 0.0
        %867 = vmatprep.subr.mxu0 0.0
        %868 = vmatpush1.msra.mxu0 0.0
        %869 = vmatprep.subr.mxu0 0.0
        %870 = vmatpush1.msra.mxu0 0.0
        %871 = vmatprep.subr.mxu0 0.0
        %872 = vmatpush1.msra.mxu0 0.0
        %873 = vmatprep.subr.mxu0 0.0
        %874 = vmatpush1.msra.mxu0 0.0
        %875 = vmatprep.subr.mxu0 0.0
        %876 = vmatpush1.msra.mxu0 0.0
        %877 = vmatprep.subr.mxu0 0.0
        %878 = vmatpush1.msra.mxu0 0.0
        %879 = vmatprep.subr.mxu0 0.0
        %880 = vmatpush1.msra.mxu0 0.0
        %881 = vmatprep.subr.mxu0 0.0
        %882 = vmatpush1.msra.mxu0 0.0
        %883 = vmatprep.subr.mxu0 0.0
        %884 = vmatpush1.msra.mxu0 0.0
        %885 = vmatprep.subr.mxu0 0.0
        %886 = vmatpush1.msra.mxu0 0.0
        %887 = vmatprep.subr.mxu0 0.0
        %888 = vmatpush1.msra.mxu0 0.0
        %889 = vmatprep.subr.mxu0 0.0
        %890 = vmatpush1.msra.mxu0 0.0
        %891 = vmatprep.subr.mxu0 0.0
        %892 = vmatpush1.msra.mxu0 0.0
        %893 = vmatprep.subr.mxu0 0.0
        %894 = vmatpush1.msra.mxu0 0.0
        %895 = vmatprep.subr.mxu0 0.0
        %896 = vmatpush1.msra.mxu0 0.0
        %897 = vmatprep.subr.mxu0 0.0
        %898 = vmatpush1.msra.mxu0 0.0
        %899 = vmatprep.subr.mxu0 0.0
        %900 = vmatpush1.msra.mxu0 0.0
        %901 = vmatprep.subr.mxu0 0.0
        %902 = vmatpush1.msra.mxu0 0.0
        %903 = vmatprep.subr.mxu0 0.0
        %904 = vmatpush1.msra.mxu0 0.0
        %905 = vmatprep.subr.mxu0 0.0
        %906 = vmatpush1.msra.mxu0 0.0
        %907 = vmatprep.subr.mxu0 0.0
        %908 = vmatpush1.msra.mxu0 0.0
        %909 = vmatprep.mubr.f32.mxu0 0.0
        %910 = vmatmul.mubr.f32.gmra.mrb[0].mxu0 %v840
        %v911 = vpop.f32.mrb[0].mxu0
        %v912 = vadd.f32 0.0, %v911
        %v913 = vpop.f32.mrb[0].mxu0
        %914 = vmatprep.mubr.f32.mxu0 0.0
        %915 = vmatmul.mubr.f32.gmra.mrb[0].mxu0 %v843
        %v916 = vpop.f32.mrb[0].mxu0
        %v917 = vadd.f32 0.0, %v916
        %v918 = vpop.f32.mrb[0].mxu0
        %919 = vdwg.mxu0
        %922 = vrot.lane.b32.xlu0 %v912, 32
        %v923 = vpop.permute.xlu0 %922
        %924 = vrot.lane.b32.xlu0 %v917, 32
        %v925 = vpop.permute.xlu0 %924
        %vm928 = vcmask 392448
        %929 = vst.msk [vmem:[#allocation2] sm:$0xff] %vm928, %v923
        %930 = vst.msk [vmem:[#allocation2 + $0x8] sm:$0xff] %vm928, %v925
        %931 = vset.pattern.permute.xlu0 7
        %932 = vperm.xlu0 %931, %v469
        %v933 = vpop.permute.xlu0 %932
        %935 = vset.pattern.permute.xlu0 7
        %936 = vperm.xlu0 %935, %v474
        %v937 = vpop.permute.xlu0 %936
        %v939 = vlaneseq
        %v940 = vshrl.u32 %v939, 7
        %v941 = vsub.s32 3, %v940
        %v942 = vrot.slane %v493, %v941
        %v943 = vadd.f32 %v933, %v942
        %v944 = vadd.f32 %v937, %v942
        %vm945 = vcmp.gt.f32.partialorder %v943, 0.0
        %vm946 = vcmp.gt.f32.partialorder %v944, 0.0
        %v947 = vmul.f32 %v943, 0.2
        %v948 = vmul.f32 %v944, 0.2
        %v949 = vsel %vm945, %v943, %v947
        %v950 = vsel %vm946, %v944, %v948
        %v951 = vsel %vm531, %v949, -inf
        %952 = vmax.xlane.f32.xlu0 %v951
        %v953 = vpop.xlane.xlu0 %952
        %v954 = vsel %vm531, %v950, -inf
        %955 = vmax.xlane.f32.xlu0 %v954
        %v956 = vpop.xlane.xlu0 %955
        %v957 = vsub.f32 %v949, %v953
        %v958 = vsub.f32 %v950, %v956
        %v959 = vmul.f32 %v957, 1.442695
        %v960 = vpow.pop %v959
        %v961 = vmul.f32 %v958, 1.442695
        %v962 = vpow.pop %v961
        %v963 = vmul.f32 %v960, %v298
        %v964 = vmul.f32 %v962, %v299
        %v965 = vsel %vm531, %v963, 0.0
        %966 = vadd.xlane.f32.xlu0 %v965
        %v967 = vpop.xlane.xlu0 %966
        %v968 = vsel %vm531, %v964, 0.0
        %969 = vadd.xlane.f32.xlu0 %v968
        %v970 = vpop.xlane.xlu0 %969
        %v971 = vmax.f32 %v967, 1e-16
        %v972 = vmax.f32 %v970, 1e-16
        %v973 = vrcp.pop %v971
        %v974 = vrcp.pop %v972
        %v975 = vmul.f32 %v963, %v973
        %v976 = vmul.f32 %v964, %v974
        %977 = vrot.lane.b32.xlu0 %v378, 80
        %v978 = vpop.permute.xlu0 %977
        %979 = vrot.lane.b32.xlu0 %v383, 80
        %v980 = vpop.permute.xlu0 %979
        %v984 = vsel %vm531, %v975, 0
        %v987 = vsel %vm531, %v976, 0
        %989 = vmatprep.subr.mxu0 0.0
        %990 = vmatpush1.msra.mxu0 %v978
        %991 = vmatprep.subr.mxu0 0.0
        %992 = vmatpush1.msra.mxu0 %v980
        %993 = vmatprep.subr.mxu0 0.0
        %994 = vmatpush1.msra.mxu0 0.0
        %995 = vmatprep.subr.mxu0 0.0
        %996 = vmatpush1.msra.mxu0 0.0
        %997 = vmatprep.subr.mxu0 0.0
        %998 = vmatpush1.msra.mxu0 0.0
        %999 = vmatprep.subr.mxu0 0.0
        %1000 = vmatpush1.msra.mxu0 0.0
        %1001 = vmatprep.subr.mxu0 0.0
        %1002 = vmatpush1.msra.mxu0 0.0
        %1003 = vmatprep.subr.mxu0 0.0
        %1004 = vmatpush1.msra.mxu0 0.0
        %1005 = vmatprep.subr.mxu0 0.0
        %1006 = vmatpush1.msra.mxu0 0.0
        %1007 = vmatprep.subr.mxu0 0.0
        %1008 = vmatpush1.msra.mxu0 0.0
        %1009 = vmatprep.subr.mxu0 0.0
        %1010 = vmatpush1.msra.mxu0 0.0
        %1011 = vmatprep.subr.mxu0 0.0
        %1012 = vmatpush1.msra.mxu0 0.0
        %1013 = vmatprep.subr.mxu0 0.0
        %1014 = vmatpush1.msra.mxu0 0.0
        %1015 = vmatprep.subr.mxu0 0.0
        %1016 = vmatpush1.msra.mxu0 0.0
        %1017 = vmatprep.subr.mxu0 0.0
        %1018 = vmatpush1.msra.mxu0 0.0
        %1019 = vmatprep.subr.mxu0 0.0
        %1020 = vmatpush1.msra.mxu0 0.0
        %1021 = vmatprep.subr.mxu0 0.0
        %1022 = vmatpush1.msra.mxu0 0.0
        %1023 = vmatprep.subr.mxu0 0.0
        %1024 = vmatpush1.msra.mxu0 0.0
        %1025 = vmatprep.subr.mxu0 0.0
        %1026 = vmatpush1.msra.mxu0 0.0
        %1027 = vmatprep.subr.mxu0 0.0
        %1028 = vmatpush1.msra.mxu0 0.0
        %1029 = vmatprep.subr.mxu0 0.0
        %1030 = vmatpush1.msra.mxu0 0.0
        %1031 = vmatprep.subr.mxu0 0.0
        %1032 = vmatpush1.msra.mxu0 0.0
        %1033 = vmatprep.subr.mxu0 0.0
        %1034 = vmatpush1.msra.mxu0 0.0
        %1035 = vmatprep.subr.mxu0 0.0
        %1036 = vmatpush1.msra.mxu0 0.0
        %1037 = vmatprep.subr.mxu0 0.0
        %1038 = vmatpush1.msra.mxu0 0.0
        %1039 = vmatprep.subr.mxu0 0.0
        %1040 = vmatpush1.msra.mxu0 0.0
        %1041 = vmatprep.subr.mxu0 0.0
        %1042 = vmatpush1.msra.mxu0 0.0
        %1043 = vmatprep.subr.mxu0 0.0
        %1044 = vmatpush1.msra.mxu0 0.0
        %1045 = vmatprep.subr.mxu0 0.0
        %1046 = vmatpush1.msra.mxu0 0.0
        %1047 = vmatprep.subr.mxu0 0.0
        %1048 = vmatpush1.msra.mxu0 0.0
        %1049 = vmatprep.subr.mxu0 0.0
        %1050 = vmatpush1.msra.mxu0 0.0
        %1051 = vmatprep.subr.mxu0 0.0
        %1052 = vmatpush1.msra.mxu0 0.0
        %1053 = vmatprep.mubr.f32.mxu0 0.0
        %1054 = vmatmul.mubr.f32.gmra.mrb[0].mxu0 %v984
        %v1055 = vpop.f32.mrb[0].mxu0
        %v1056 = vadd.f32 0.0, %v1055
        %v1057 = vpop.f32.mrb[0].mxu0
        %1058 = vmatprep.mubr.f32.mxu0 0.0
        %1059 = vmatmul.mubr.f32.gmra.mrb[0].mxu0 %v987
        %v1060 = vpop.f32.mrb[0].mxu0
        %v1061 = vadd.f32 0.0, %v1060
        %v1062 = vpop.f32.mrb[0].mxu0
        %1063 = vdwg.mxu0
        %1066 = vrot.lane.b32.xlu0 %v1056, 48
        %v1067 = vpop.permute.xlu0 %1066
        %1068 = vrot.lane.b32.xlu0 %v1061, 48
        %v1069 = vpop.permute.xlu0 %1068
        %vm1072 = vcmask 523648
        %1073 = vst.msk [vmem:[#allocation2] sm:$0xff] %vm1072, %v1067
        %1074 = vst.msk [vmem:[#allocation2 + $0x8] sm:$0xff] %vm1072, %v1069
        %1075 = vst.msk [vmem:[%s285] sm:$0xff] %vm531, %v556
        %1076 = vst.msk [vmem:[%s285 + $0x8] sm:$0xff] %vm531, %v557
        %1077 = vst.msk [vmem:[%s285 + $0x10] sm:$0xff] %vm531, %v685
        %1078 = vst.msk [vmem:[%s285 + $0x18] sm:$0xff] %vm531, %v686
        %1079 = vst.msk [vmem:[%s285 + $0x20] sm:$0xff] %vm531, %v831
        %1080 = vst.msk [vmem:[%s285 + $0x28] sm:$0xff] %vm531, %v832
        %1081 = vst.msk [vmem:[%s285 + $0x30] sm:$0xff] %vm531, %v975
        %1082 = vst.msk [vmem:[%s285 + $0x38] sm:$0xff] %vm531, %v976
        %v1083 = vld [vmem:[%s4] sm:$0x1]
        %v1084 = vld [vmem:[%s4 + $0x1] sm:$0x1]
        %v1085 = vld [vmem:[%s4 + $0x2] sm:$0x1]
        %v1086 = vld [vmem:[%s4 + $0x3] sm:$0x1]
        %v1087 = vld [vmem:[#allocation2] sm:$0xff]
        %v1088 = vld [vmem:[#allocation2 + $0x8] sm:$0xff]
        %v1089 = vlaneseq
        %v1090 = vshrl.u32 %v1089, 7
        %v1091 = vsub.s32 0, %v1090
        %v1092 = vrot.slane %v1083, %v1091
        %v1093 = vadd.f32 %v1087, %v1092
        %v1094 = vadd.f32 %v1088, %v1092
        %vm1095 = vcmask 523264
        %v1096 = vsel %vm1095, %v1093, 0.0
        %1097 = vadd.xlane.f32.xlu0 %v1096
        %v1098 = vpop.xlane.xlu0 %1097
        %v1099 = vsel %vm1095, %v1094, 0.0
        %1100 = vadd.xlane.f32.xlu0 %v1099
        %v1101 = vpop.xlane.xlu0 %1100
        %v1102 = vrcp.pop 64.0
        %v1103 = vmul.f32 %v1098, %v1102
        %v1104 = vmul.f32 %v1101, %v1102
        %v1105 = vsub.f32 %v1093, %v1103
        %v1106 = vsub.f32 %v1094, %v1104
        %v1107 = vmul.f32 %v1105, %v1105
        %v1108 = vmul.f32 %v1106, %v1106
        %v1109 = vsel %vm1095, %v1107, 0.0
        %1110 = vadd.xlane.f32.xlu0 %v1109
        %v1111 = vpop.xlane.xlu0 %1110
        %v1112 = vsel %vm1095, %v1108, 0.0
        %1113 = vadd.xlane.f32.xlu0 %v1112
        %v1114 = vpop.xlane.xlu0 %1113
        %v1115 = vmul.f32 %v1111, %v1102
        %v1116 = vmul.f32 %v1114, %v1102
        %v1117 = vadd.f32 %v1115, 1e-05
        %v1118 = vadd.f32 %v1116, 1e-05
        %v1119 = vrsqrt.pop %v1117
        %v1120 = vrsqrt.pop %v1118
        %v1121 = vmul.f32 %v1105, %v1119
        %v1122 = vmul.f32 %v1106, %v1120
        %v1123 = vlaneseq
        %v1124 = vshrl.u32 %v1123, 7
        %v1125 = vsub.s32 0, %v1124
        %v1126 = vrot.slane %v1084, %v1125
        %v1127 = vmul.f32 %v1121, %v1126
        %v1128 = vmul.f32 %v1122, %v1126
        %v1129 = vlaneseq
        %v1130 = vshrl.u32 %v1129, 7
        %v1131 = vsub.s32 0, %v1130
        %v1132 = vrot.slane %v1085, %v1131
        %v1133 = vadd.f32 %v1127, %v1132
        %v1134 = vadd.f32 %v1128, %v1132
        %vm1135 = vcmp.gt.f32.partialorder %v1133, 0.0
        %vm1136 = vcmp.gt.f32.partialorder %v1134, 0.0
        %v1137 = vlaneseq
        %v1138 = vshrl.u32 %v1137, 7
        %v1139 = vsub.s32 0, %v1138
        %v1140 = vrot.slane %v1086, %v1139
        %v1141 = vmul.f32 %v1140, %v1133
        %v1142 = vmul.f32 %v1140, %v1134
        %v1143 = vsel %vm1135, %v1133, %v1141
        %v1144 = vsel %vm1136, %v1134, %v1142
        %1145 = vst.msk [vmem:[%s278] sm:$0xff] %vm1095, %v1143
        %1146 = vst.msk [vmem:[%s278 + $0x8] sm:$0xff] %vm1095, %v1144
        %s1147 = sand.u32 %s148, 1
        %s1148 = scalar_lea.sflag [#allocation5], %s1147
        %s1149 = sand.u32 %s148, 1
        %s1150 = smul.addr %s1149, 16
        %s1151 = scalar_lea.vmem [#allocation6], %s1150
        %s1152 = sand.u32 %s174, 1
        %s1153 = scalar_lea.sflag [#allocation8], %s1152
        %s1154 = sand.u32 %s174, 1
        %s1155 = smul.addr %s1154, 64
        %s1156 = scalar_lea.vmem [#allocation7], %s1155
        // Predicated region
        $region45: #{tpu_custom_call.1} parent=39 // pred_check
          %p1157 = pneg %p158
        $region46: #{tpu_custom_call.1} parent=39 // pred_check_branch
          %1159 = sbr.rel (%p1157) target = $region48
        $region47: #{tpu_custom_call.1} parent=39 // pred_region
          %s1161 = ssub.s32 256, 256
          %1162 = vsyncadd %s1148, %s1161
          %s1163 = smul.addr %s25, 2
          %s1164 = smul.addr %s1163, 128
          %s1165 = scalar_lea.hbm %s5, %s1164
          %s1166 = sshll.u32 %s1151, 4
          %s1167 = int_to_ptr.vmem [resolvable:$true] %s1166
          %1172 = dma.vmem_to_hbm [thread:$0]  %s1167, 256, %s1165, %s1148, 128, 128, 8
        $region48: #{tpu_custom_call.1} parent=39 // pred_fallthru
          _
        // Predicated region
        $region49: #{tpu_custom_call.1} parent=39 // pred_check
          %p1173 = pneg %p184
        $region50: #{tpu_custom_call.1} parent=39 // pred_check_branch
          %1175 = sbr.rel (%p1173) target = $region52
        $region51: #{tpu_custom_call.1} parent=39 // pred_region
          %s1177 = ssub.s32 1024, 1024
          %1178 = vsyncadd %s1153, %s1177
          %s1179 = smul.addr %s25, 8
          %s1180 = smul.addr %s1179, 128
          %s1181 = scalar_lea.hbm %s6, %s1180
          %s1182 = sshll.u32 %s1156, 4
          %s1183 = int_to_ptr.vmem [resolvable:$true] %s1182
          %1188 = dma.vmem_to_hbm [thread:$0]  %s1183, 1024, %s1181, %s1153, 128, 128, 8
        $region52: #{tpu_custom_call.1} parent=39 // pred_fallthru
          _
      $region40: #{tpu_custom_call.1} parent=5 // pred_fallthru
        _
      %p1189 = scmp.le.s32.totalorder 2, %s20
      // Predicated region
      $region53: #{tpu_custom_call.1} parent=5 // pred_check
        %p1190 = pneg %p1189
      $region54: #{tpu_custom_call.1} parent=5 // pred_check_branch
        %1192 = sbr.rel (%p1190) target = $region56
      $region55: #{tpu_custom_call.1} parent=5 // pred_region
        %s1193 = ssub.s32 %s20, 2
        // Predicated region
        $region57: #{tpu_custom_call.1} parent=55 // pred_check
          %p1194 = pneg %p164
        $region58: #{tpu_custom_call.1} parent=55 // pred_check_branch
          %1196 = sbr.rel (%p1194) target = $region60
        $region59: #{tpu_custom_call.1} parent=55 // pred_region
          %s1197 = sand.u32 %s149, 1
          %s1198 = scalar_lea.sflag [#allocation5], %s1197
          %s1199 = sand.u32 %s149, 1
          %s1200 = smul.addr %s1199, 16
          %s1201 = scalar_lea.vmem [#allocation6], %s1200
          %1202 = dma.done %s1198, 256
        $region60: #{tpu_custom_call.1} parent=55 // pred_fallthru
          _
        // Predicated region
        $region61: #{tpu_custom_call.1} parent=55 // pred_check
          %p1203 = pneg %p190
        $region62: #{tpu_custom_call.1} parent=55 // pred_check_branch
          %1205 = sbr.rel (%p1203) target = $region64
        $region63: #{tpu_custom_call.1} parent=55 // pred_region
          %s1206 = sand.u32 %s175, 1
          %s1207 = scalar_lea.sflag [#allocation8], %s1206
          %s1208 = sand.u32 %s175, 1
          %s1209 = smul.addr %s1208, 64
          %s1210 = scalar_lea.vmem [#allocation7], %s1209
          %1211 = dma.done %s1207, 1024
        $region64: #{tpu_custom_call.1} parent=55 // pred_fallthru
          _
      $region56: #{tpu_custom_call.1} parent=5 // pred_fallthru
        _
    $region6: #{tpu_custom_call.1} parent=1 // loop_footer
      %s24 = sadd.s32 1, %s20
    $region7: #{tpu_custom_call.1} parent=1 // loop_footer_branch
      %19 = sbr.rel target = $region3
    $region8: #{tpu_custom_call.1} parent=1 // loop_exit
      _
    %1212 = vsyncpa [#allocation4], 1
    %s1213 = scalar_lea.sflag [#allocation4], 1
    %1214 = vsyncpa %s1213, 1
    %1215 = vsyncpa [#allocation5], 1
    %s1216 = scalar_lea.sflag [#allocation5], 1
    %1217 = vsyncpa %s1216, 1
    %1218 = vsyncpa [#allocation8], 1
    %s1219 = scalar_lea.sflag [#allocation8], 1
    %1220 = vsyncpa %s1219, 1

</llo_original>
